<compile_context>
chip_gen: v5e
topology: v5e:2x2
jax: 0.10.0
libtpu: 0.0.40
codegen_flags: <defaults>
</compile_context>

<pallas_src>
import functools

import numpy as np
import jax
import jax.numpy as jnp
from jax import lax
from jax.experimental import pallas as pl
from jax.experimental.pallas import tpu as pltpu

# ---------------------------------------------------------------------------
# "args" stand-ins (the original code reads a global `args`)
# ---------------------------------------------------------------------------
L = 2                 # args.L
CHOOSING_TMP = 1.0    # args.choosing_tmp
WALK_LENGTH = 3       # args.walk_length
AREA_NUM = 16         # args.areaNum  (= number of graph nodes)
EMB = 32              # embeddingsize

_SEG = 128            # lane-segment width inside the packed slabs


def _round_up(x, m):
    return ((x + m - 1) // m) * m


# ---------------------------------------------------------------------------
# Fused Pallas kernel: one grid step = one full forward pass
# ---------------------------------------------------------------------------
def _fused_forward_kernel(graph_ref, pt_ref, ps_ref,
                          x_ref, xt_ref, tnoise_ref, snoise_ref, out_ref,
                          *, n, e, l, nnz_pad, pe, tmp, area_num):
    f32 = jnp.float32
    le = l * e
    seg = _SEG
    inv_tmp = 1.0 / tmp
    inv_mean = 1.0 / float(l + 1)

    # ---- shared graph slab: [ A | RW | row_ohT | col_ohT ] (128-lane segs) ----
    A       = graph_ref[:, 0:n]                               # (N, N) sym-norm adj
    RW      = graph_ref[:, seg:seg + n]                       # (N, N) random-walk pool
    rc_ohT  = graph_ref[:, 2 * seg:2 * seg + 2 * nnz_pad]     # (N, 2*NNZ_pad)
    row_ohT = rc_ohT[:, :nnz_pad]                             # (N, NNZ_pad)
    col_ohT = rc_ohT[:, nnz_pad:]                             # (N, NNZ_pad)

    # ---- shared parameter slabs ----
    W1tT = pt_ref[0:le, 0:2 * e]            # (LE, 2E): rows i*E.. = layer-i Linear(2E->E).T
    b1tT = pt_ref[0:le, seg:seg + 1]        # (LE, 1)
    W2tb = pt_ref[le:le + l, 0:le]          # (L, LE) block-diagonal Linear(E->1) rows
    b2tT = pt_ref[le:le + l, seg:seg + 1]   # (L, 1)
    W1rT, W1cT = W1tT[:, :e], W1tT[:, e:]

    w1s_all = ps_ref[0:e, 0:le]             # (E, LE): layer i in cols [i*E:(i+1)*E]
    b1s_all = ps_ref[e:e + 1, 0:le]         # (1, LE)
    w2s_all = ps_ref[e + 1:e + 2, 0:le]     # (1, LE)
    b2s_all = ps_ref[e + 2:e + 3, 0:l]      # (1, L)
    a_vals  = ps_ref[e + 3:e + 4, 0:nnz_pad]   # (1, NNZ_pad) per-edge A_norm values

    # ---- per-forward inputs ----
    X   = x_ref[...]                        # (N, E)  crime_embedding
    XT  = xt_ref[...]                       # (E, N)
    tnz = tnoise_ref[...]                   # (L, NNZ_pad) precomputed log(eps)-log(1-eps)
    snz = snoise_ref[...]                   # (N, L)       precomputed log(eps)-log(1-eps)

    # ---- t-mask learner, hoisted & batched over all L layers (edges on lanes) ----
    # torch feeds cat([X[row], X[col]]) (layer invariant) into every layer's MLP.
    g  = jnp.dot(XT, rc_ohT, preferred_element_type=f32)            # (E, 2*NNZ_pad)
    hT = (jnp.dot(W1rT, g[:, :nnz_pad], preferred_element_type=f32)
          + jnp.dot(W1cT, g[:, nnz_pad:], preferred_element_type=f32)
          + b1tT)                                                    # (LE, NNZ_pad)
    hT = jnp.maximum(hT, 0.0)
    logitT  = jnp.dot(W2tb, hT, preferred_element_type=f32) + b2tT   # (L, NNZ_pad)
    t_masks = jax.nn.sigmoid((tnz + logitT) * inv_tmp)               # (L, NNZ_pad)

    # ---- phase 1: plain propagation feeding the per-layer s-mask learner ----
    cur = X
    s_masks = []
    for i in range(l):
        cur = jnp.dot(A, cur, preferred_element_type=f32)
        w1s = w1s_all[:, i * e:(i + 1) * e]
        h = jnp.maximum(jnp.dot(cur, w1s, preferred_element_type=f32)
                        + b1s_all[:, i * e:(i + 1) * e], 0.0)
        logit_s = (jnp.sum(h * w2s_all[:, i * e:(i + 1) * e], axis=-1, keepdims=True)
                   + b2s_all[:, i:i + 1])                            # (N, 1)
        s_masks.append(jax.nn.sigmoid((snz[:, i:i + 1] + logit_s) * inv_tmp))

    # ---- t branch: edge-masked propagation (A values folded into the mask) ----
    cur_t = X
    acc_t = X
    for i in range(l):
        masked = row_ohT * (a_vals * t_masks[i:i + 1, :])            # (N, NNZ_pad)
        a_t = lax.dot_general(masked, col_ohT,
                              dimension_numbers=(((1,), (1,)), ((), ())),
                              preferred_element_type=f32)            # (N, N) masked adj
        cur_t = jnp.dot(a_t, cur_t, preferred_element_type=f32)
        acc_t = acc_t + cur_t

    # ---- s branch: node-masked mixing with random-walk pooling ----
    cur_s = X
    acc_s = X
    s_reg = jnp.zeros((1, 1), f32)
    for i in range(l):
        pooled = jnp.dot(RW, cur_s, preferred_element_type=f32)
        m = s_masks[i]
        cur_s = jnp.dot(A, m * cur_s + (1.0 - m) * pooled, preferred_element_type=f32)
        acc_s = acc_s + cur_s
        s_reg = s_reg + jnp.sum(m, axis=0, keepdims=True) * (1.0 / float(area_num))
    s_reg = s_reg * (1.0 / float(l))

    # ---- single lane-dense packed output store ----
    emb = jnp.concatenate([acc_t * inv_mean, acc_s * inv_mean], axis=-1)   # (N, 2E)
    sreg_fill = jnp.zeros((n, pe - 2 * e), f32) + s_reg                    # (N, PE-2E)
    mask_fill = jnp.zeros((n, nnz_pad), f32) + t_masks[l - 1:l, :]         # (N, NNZ_pad)
    out_ref[...] = jnp.concatenate([emb, sreg_fill, mask_fill], axis=-1)


# ---------------------------------------------------------------------------
# JAX wrapper: B independent forwards in one pallas_call (parallel grid axis)
# ---------------------------------------------------------------------------
def normalgraph_ib_forward(graph_slab, pt_slab, ps_slab, x_b, tnoise_b, snoise_b,
                           *, nnz, tmp=CHOOSING_TMP, area_num=AREA_NUM):
    B, N, E = x_b.shape
    Ln = tnoise_b.shape[1]
    nnz_pad = tnoise_b.shape[2]
    pe = _round_up(2 * E + 1, 128)
    wout = pe + nnz_pad
    xt_b = jnp.swapaxes(x_b, 1, 2)

    kernel = functools.partial(_fused_forward_kernel, n=N, e=E, l=Ln,
                               nnz_pad=nnz_pad, pe=pe, tmp=float(tmp),
                               area_num=int(area_num))

    def shared_spec(arr):
        return pl.BlockSpec(tuple(arr.shape), lambda b, _nd=arr.ndim: (0,) * _nd)

    def batched_spec(arr):
        nd = arr.ndim
        return pl.BlockSpec((None,) + tuple(arr.shape[1:]),
                            lambda b, _nd=nd: (b,) + (0,) * (_nd - 1))

    # advisory cost hint so XLA does not pessimistically serialize the call
    flops_per_b = (
        2 * E * N * 2 * nnz_pad                       # merged edge gather
        + 4 * (Ln * E) * E * nnz_pad                  # batched Linear(2E -> L*E)
        + 2 * Ln * (Ln * E) * nnz_pad                 # block-diag Linear(-> L)
        + Ln * (2 * N * N * E + 2 * N * E * E         # phase-1 prop + s MLP
                + 2 * N * nnz_pad * N + 2 * N * N * E # t branch
                + 4 * N * N * E + 6 * N * E))         # s branch
    bytes_accessed = 4 * (graph_slab.size + pt_slab.size + ps_slab.size
                          + 2 * x_b.size + tnoise_b.size + snoise_b.size
                          + B * N * wout)

    out = pl.pallas_call(
        kernel,
        out_shape=jax.ShapeDtypeStruct((B, N, wout), jnp.float32),
        grid=(B,),
        in_specs=[shared_spec(graph_slab), shared_spec(pt_slab), shared_spec(ps_slab),
                  batched_spec(x_b), batched_spec(xt_b),
                  batched_spec(tnoise_b), batched_spec(snoise_b)],
        out_specs=pl.BlockSpec((None, N, wout), lambda b: (b, 0, 0)),
        compiler_params=pltpu.CompilerParams(dimension_semantics=("parallel",)),
        cost_estimate=pl.CostEstimate(flops=int(B * flops_per_b),
                                      transcendentals=int(B * Ln * (nnz_pad + N)),
                                      bytes_accessed=int(bytes_accessed)),
    )(graph_slab, pt_slab, ps_slab, x_b, xt_b, tnoise_b, snoise_b)

    all_t = out[:, :, 0:E]                      # all_embeddings_t
    all_s = out[:, :, E:2 * E]                  # all_embeddings_s
    s_reg = out[:, 0, 2 * E]                    # scalar per forward
    t_mask = out[:, 0, pe:pe + nnz]             # last layer's edge mask
    t_reg = jnp.zeros((B,), jnp.float32)        # torch: t_reg = 0 / args.L
    return all_t, all_s, t_reg, s_reg, t_mask


# ---------------------------------------------------------------------------
# Graph / parameter setup (host-side glue, mirrors create_sparse_adjaceny)
# ---------------------------------------------------------------------------
def build_graph(area_num, walk_length, seed=0):
    rng = np.random.default_rng(seed)
    A = (rng.random((area_num, area_num)) < 0.3).astype(np.float32)
    A = np.maximum(A, A.T)
    np.fill_diagonal(A, 1.0)   # guarantee degree > 0

    deg = A.sum(axis=1)
    d_is = np.where(deg > 0, deg ** -0.5, 0.0)
    A_norm = (d_is[:, None] * A * d_is[None, :]).astype(np.float32)

    rows, cols = np.nonzero(A_norm)   # coalesced row-major edge order

    # TODO(synk): torch_cluster.random_walk has no JAX/Pallas equivalent;
    # emulated with a seeded numpy walk (same semantics, different RNG stream).
    neigh = [np.nonzero(A[i])[0] for i in range(area_num)]
    walk = np.zeros((area_num, walk_length + 1), dtype=np.int64)
    walk[:, 0] = np.arange(area_num)
    cur = np.arange(area_num)
    for step in range(1, walk_length + 1):
        nxt = np.empty(area_num, dtype=np.int64)
        for v in range(area_num):
            nb = neigh[cur[v]]
            nxt[v] = nb[rng.integers(len(nb))] if len(nb) else cur[v]
        walk[:, step] = nxt
        cur = nxt
    rw = np.zeros((area_num, area_num), dtype=np.float32)
    for v in range(area_num):
        rw[v, walk[v]] = 1.0
    deg_rw = rw.sum(axis=1)
    d_inv = np.where(deg_rw > 0, 1.0 / deg_rw, 0.0)
    rw_adj = (d_inv[:, None] * rw).astype(np.float32)

    return A_norm, rw_adj, rows, cols


def build_edge_structs(A_norm, rows, cols):
    n = A_norm.shape[0]
    nnz = int(rows.shape[0])
    nnz_pad = _round_up(max(nnz, 1), 128)
    row_ohT = np.zeros((n, nnz_pad), np.float32)
    col_ohT = np.zeros((n, nnz_pad), np.float32)
    row_ohT[rows, np.arange(nnz)] = 1.0
    col_ohT[cols, np.arange(nnz)] = 1.0
    a_vals = np.zeros((nnz_pad,), np.float32)
    a_vals[:nnz] = A_norm[rows, cols]
    return row_ohT, col_ohT, a_vals, nnz, nnz_pad


def pack_graph(A_norm, rw_adj, row_ohT, col_ohT):
    n = A_norm.shape[0]
    assert n <= _SEG
    nnz_pad = row_ohT.shape[1]
    g = np.zeros((n, 2 * _SEG + 2 * nnz_pad), np.float32)
    g[:, 0:n] = A_norm
    g[:, _SEG:_SEG + n] = rw_adj
    g[:, 2 * _SEG:2 * _SEG + nnz_pad] = row_ohT
    g[:, 2 * _SEG + nnz_pad:] = col_ohT
    return jnp.asarray(g)


def init_params(key, emb, n_layers):
    def lin(k, fan_in, w_shape, b_shape):
        kw, kb = jax.random.split(k)
        bound = 1.0 / np.sqrt(fan_in)
        return (jax.random.uniform(kw, w_shape, jnp.float32, -bound, bound),
                jax.random.uniform(kb, b_shape, jnp.float32, -bound, bound))

    params = []
    for _ in range(n_layers):
        key, k1, k2, k3, k4 = jax.random.split(key, 5)
        w1t, b1t = lin(k1, 2 * emb, (2 * emb, emb), (emb,))   # Linear(2E->E), (in,out)
        w2t, b2t = lin(k2, emb, (emb,), (1,))                 # Linear(E->1)
        w1s, b1s = lin(k3, emb, (emb, emb), (emb,))           # Linear(E->E)
        w2s, b2s = lin(k4, emb, (emb,), (1,))                 # Linear(E->1)
        params.append(dict(w1t=w1t, b1t=b1t, w2t=w2t, b2t=b2t,
                           w1s=w1s, b1s=b1s, w2s=w2s, b2s=b2s))
    return params


def pack_params(params, a_vals, emb, n_layers, nnz_pad):
    E, Ln = emb, n_layers
    LE = Ln * E
    assert 2 * E <= _SEG and LE <= _SEG

    pt = np.zeros((_round_up(LE + Ln, 8), 2 * _SEG), np.float32)
    for i, p in enumerate(params):
        pt[i * E:(i + 1) * E, 0:2 * E] = np.asarray(p["w1t"]).T       # (E, 2E)
        pt[i * E:(i + 1) * E, _SEG] = np.asarray(p["b1t"])
        pt[LE + i, i * E:(i + 1) * E] = np.asarray(p["w2t"])          # block-diag row
        pt[LE + i, _SEG] = float(np.asarray(p["b2t"])[0])

    psw = max(_SEG, nnz_pad)
    ps = np.zeros((_round_up(E + 4, 8), psw), np.float32)
    for i, p in enumerate(params):
        ps[0:E, i * E:(i + 1) * E] = np.asarray(p["w1s"])
        ps[E, i * E:(i + 1) * E] = np.asarray(p["b1s"])
        ps[E + 1, i * E:(i + 1) * E] = np.asarray(p["w2s"])
        ps[E + 2, i] = float(np.asarray(p["b2s"])[0])
    ps[E + 3, 0:nnz_pad] = a_vals
    return jnp.asarray(pt), jnp.asarray(ps)


def gumbel_logit_noise(key, shape):
    # torch: eps = (bias - (1-bias))*rand + (1-bias);  gate noise = log(eps)-log(1-eps)
    bias = 1e-4
    u = jax.random.uniform(key, shape, jnp.float32)
    eps = (bias - (1.0 - bias)) * u + (1.0 - bias)
    return jnp.log(eps) - jnp.log(1.0 - eps)


# ---------------------------------------------------------------------------
if __name__ == "__main__":
    key = jax.random.PRNGKey(0)

    A_norm, rw_adj, rows, cols = build_graph(AREA_NUM, WALK_LENGTH, seed=0)
    row_ohT, col_ohT, a_vals, NNZ, NNZ_PAD = build_edge_structs(A_norm, rows, cols)

    key, kp = jax.random.split(key)
    params = init_params(kp, EMB, L)
    graph_slab = pack_graph(A_norm, rw_adj, row_ohT, col_ohT)
    pt_slab, ps_slab = pack_params(params, a_vals, EMB, L, NNZ_PAD)

    # B independent forward passes (own embedding + fresh gumbel noise each),
    # fused into a single pallas_call with a "parallel" grid axis.
    B = 4
    key, kx, kt, ks = jax.random.split(key, 4)
    x_b = jax.random.normal(kx, (B, AREA_NUM, EMB), jnp.float32)
    tnoise_b = gumbel_logit_noise(kt, (B, L, NNZ_PAD))
    snoise_b = gumbel_logit_noise(ks, (B, AREA_NUM, L))

    fwd = jax.jit(functools.partial(normalgraph_ib_forward, nnz=NNZ))
    outs = jax.block_until_ready(fwd(graph_slab, pt_slab, ps_slab,
                                     x_b, tnoise_b, snoise_b))

    all_t, all_s, t_reg, s_reg, t_mask = outs
    assert all_t.shape == (B, AREA_NUM, EMB)
    assert all_s.shape == (B, AREA_NUM, EMB)
    assert t_mask.shape == (B, NNZ)
    assert np.all(np.isfinite(np.asarray(all_t)))
    assert np.all(np.isfinite(np.asarray(all_s)))
    assert np.all(np.isfinite(np.asarray(s_reg)))
    assert np.all((np.asarray(t_mask) >= 0.0) & (np.asarray(t_mask) <= 1.0))
    assert np.all(np.asarray(t_reg) == 0.0)
    print("KERNEL_OK")
</pallas_src>

<mosaic_0001>
module attributes {stable_mosaic.version = 11 : i64} {
  func.func @_fused_forward_kernel(%arg0: i32, %arg1: memref<16x768xf32, #tpu.memory_space<vmem>>, %arg2: memref<72x256xf32, #tpu.memory_space<vmem>>, %arg3: memref<40x256xf32, #tpu.memory_space<vmem>>, %arg4: memref<1x16x32xf32, #tpu.memory_space<vmem>>, %arg5: memref<1x32x16xf32, #tpu.memory_space<vmem>>, %arg6: memref<1x2x256xf32, #tpu.memory_space<vmem>>, %arg7: memref<1x16x2xf32, #tpu.memory_space<vmem>>, %arg8: memref<1x16x384xf32, #tpu.memory_space<vmem>>) attributes {dimension_semantics = [#tpu.dimension_semantics<parallel>], iteration_bounds = array<i64: 4>, scalar_prefetch = 0 : i64, scratch_operands = 0 : i64, tpu.core_type = #tpu.core_type<tc>, window_params = [{pipeline_mode = #tpu.pipeline_mode<synchronous>, transform_indices = @transform_0, window_bounds = array<i64: 16, 768>}, {pipeline_mode = #tpu.pipeline_mode<synchronous>, transform_indices = @transform_1, window_bounds = array<i64: 72, 256>}, {pipeline_mode = #tpu.pipeline_mode<synchronous>, transform_indices = @transform_2, window_bounds = array<i64: 40, 256>}, {transform_indices = @transform_3, window_bounds = array<i64: 1, 16, 32>}, {transform_indices = @transform_4, window_bounds = array<i64: 1, 32, 16>}, {transform_indices = @transform_5, window_bounds = array<i64: 1, 2, 256>}, {transform_indices = @transform_6, window_bounds = array<i64: 1, 16, 2>}, {transform_indices = @transform_7, window_bounds = array<i64: 1, 16, 384>}]} {
    %c0 = arith.constant 0 : index
    %c0_0 = arith.constant 0 : index
    %0 = vector.load %arg1[%c0, %c0_0] : memref<16x768xf32, #tpu.memory_space<vmem>>, vector<16x16xf32>
    %c0_1 = arith.constant 0 : index
    %c128 = arith.constant 128 : index
    %1 = vector.load %arg1[%c0_1, %c128] : memref<16x768xf32, #tpu.memory_space<vmem>>, vector<16x16xf32>
    %c0_2 = arith.constant 0 : index
    %c256 = arith.constant 256 : index
    %2 = vector.load %arg1[%c0_2, %c256] : memref<16x768xf32, #tpu.memory_space<vmem>>, vector<16x512xf32>
    %3 = vector.extract_strided_slice %2 {offsets = [0, 0], sizes = [16, 256], strides = [1, 1]} : vector<16x512xf32> to vector<16x256xf32>
    %4 = vector.extract_strided_slice %2 {offsets = [0, 256], sizes = [16, 256], strides = [1, 1]} : vector<16x512xf32> to vector<16x256xf32>
    %c0_3 = arith.constant 0 : index
    %c0_4 = arith.constant 0 : index
    %5 = vector.load %arg2[%c0_3, %c0_4] : memref<72x256xf32, #tpu.memory_space<vmem>>, vector<64x64xf32>
    %c0_5 = arith.constant 0 : index
    %c128_6 = arith.constant 128 : index
    %6 = vector.load %arg2[%c0_5, %c128_6] : memref<72x256xf32, #tpu.memory_space<vmem>>, vector<64x1xf32>
    %c64 = arith.constant 64 : index
    %c0_7 = arith.constant 0 : index
    %7 = vector.load %arg2[%c64, %c0_7] : memref<72x256xf32, #tpu.memory_space<vmem>>, vector<2x64xf32>
    %c64_8 = arith.constant 64 : index
    %c128_9 = arith.constant 128 : index
    %8 = vector.load %arg2[%c64_8, %c128_9] : memref<72x256xf32, #tpu.memory_space<vmem>>, vector<2x1xf32>
    %9 = vector.extract_strided_slice %5 {offsets = [0, 0], sizes = [64, 32], strides = [1, 1]} : vector<64x64xf32> to vector<64x32xf32>
    %10 = vector.extract_strided_slice %5 {offsets = [0, 32], sizes = [64, 32], strides = [1, 1]} : vector<64x64xf32> to vector<64x32xf32>
    %c0_10 = arith.constant 0 : index
    %c0_11 = arith.constant 0 : index
    %11 = vector.load %arg3[%c0_10, %c0_11] : memref<40x256xf32, #tpu.memory_space<vmem>>, vector<32x64xf32>
    %c32 = arith.constant 32 : index
    %c0_12 = arith.constant 0 : index
    %12 = vector.load %arg3[%c32, %c0_12] : memref<40x256xf32, #tpu.memory_space<vmem>>, vector<1x64xf32>
    %c33 = arith.constant 33 : index
    %c0_13 = arith.constant 0 : index
    %13 = vector.load %arg3[%c33, %c0_13] : memref<40x256xf32, #tpu.memory_space<vmem>>, vector<1x64xf32>
    %c34 = arith.constant 34 : index
    %c0_14 = arith.constant 0 : index
    %14 = vector.load %arg3[%c34, %c0_14] : memref<40x256xf32, #tpu.memory_space<vmem>>, vector<1x2xf32>
    %c35 = arith.constant 35 : index
    %c0_15 = arith.constant 0 : index
    %15 = vector.load %arg3[%c35, %c0_15] : memref<40x256xf32, #tpu.memory_space<vmem>>, vector<1x256xf32>
    %c0_16 = arith.constant 0 : index
    %c0_17 = arith.constant 0 : index
    %c0_18 = arith.constant 0 : index
    %16 = vector.load %arg4[%c0_16, %c0_17, %c0_18] : memref<1x16x32xf32, #tpu.memory_space<vmem>>, vector<1x16x32xf32>
    %17 = vector.shape_cast %16 : vector<1x16x32xf32> to vector<16x32xf32>
    %c0_19 = arith.constant 0 : index
    %c0_20 = arith.constant 0 : index
    %c0_21 = arith.constant 0 : index
    %18 = vector.load %arg5[%c0_19, %c0_20, %c0_21] : memref<1x32x16xf32, #tpu.memory_space<vmem>>, vector<1x32x16xf32>
    %19 = vector.shape_cast %18 : vector<1x32x16xf32> to vector<32x16xf32>
    %c0_22 = arith.constant 0 : index
    %c0_23 = arith.constant 0 : index
    %c0_24 = arith.constant 0 : index
    %20 = vector.load %arg6[%c0_22, %c0_23, %c0_24] : memref<1x2x256xf32, #tpu.memory_space<vmem>>, vector<1x2x256xf32>
    %21 = vector.shape_cast %20 : vector<1x2x256xf32> to vector<2x256xf32>
    %c0_25 = arith.constant 0 : index
    %c0_26 = arith.constant 0 : index
    %c0_27 = arith.constant 0 : index
    %22 = vector.load %arg7[%c0_25, %c0_26, %c0_27] : memref<1x16x2xf32, #tpu.memory_space<vmem>>, vector<1x16x2xf32>
    %23 = vector.shape_cast %22 : vector<1x16x2xf32> to vector<16x2xf32>
    %cst = arith.constant dense<0.000000e+00> : vector<32x512xf32>
    %24 = tpu.matmul %19, %2, %cst {dimension_numbers = #tpu.dot_dimension_numbers<[1], [0], [0], [1], [0, 0, 1, 1], [], []>} : vector<32x16xf32>, vector<16x512xf32>, vector<32x512xf32> -> vector<32x512xf32>
    %25 = vector.extract_strided_slice %24 {offsets = [0, 0], sizes = [32, 256], strides = [1, 1]} : vector<32x512xf32> to vector<32x256xf32>
    %cst_28 = arith.constant dense<0.000000e+00> : vector<64x256xf32>
    %26 = tpu.matmul %9, %25, %cst_28 {dimension_numbers = #tpu.dot_dimension_numbers<[1], [0], [0], [1], [0, 0, 1, 1], [], []>} : vector<64x32xf32>, vector<32x256xf32>, vector<64x256xf32> -> vector<64x256xf32>
    %27 = vector.extract_strided_slice %24 {offsets = [0, 256], sizes = [32, 256], strides = [1, 1]} : vector<32x512xf32> to vector<32x256xf32>
    %cst_29 = arith.constant dense<0.000000e+00> : vector<64x256xf32>
    %28 = tpu.matmul %10, %27, %cst_29 {dimension_numbers = #tpu.dot_dimension_numbers<[1], [0], [0], [1], [0, 0, 1, 1], [], []>} : vector<64x32xf32>, vector<32x256xf32>, vector<64x256xf32> -> vector<64x256xf32>
    %29 = arith.addf %26, %28 : vector<64x256xf32>
    %30 = vector.broadcast %6 : vector<64x1xf32> to vector<64x256xf32>
    %31 = arith.addf %29, %30 : vector<64x256xf32>
    %cst_30 = arith.constant 0.000000e+00 : f32
    %32 = vector.broadcast %cst_30 : f32 to vector<64x256xf32>
    %33 = arith.maximumf %31, %32 : vector<64x256xf32>
    %cst_31 = arith.constant dense<0.000000e+00> : vector<2x256xf32>
    %34 = tpu.matmul %7, %33, %cst_31 {dimension_numbers = #tpu.dot_dimension_numbers<[1], [0], [0], [1], [0, 0, 1, 1], [], []>} : vector<2x64xf32>, vector<64x256xf32>, vector<2x256xf32> -> vector<2x256xf32>
    %35 = vector.broadcast %8 : vector<2x1xf32> to vector<2x256xf32>
    %36 = arith.addf %34, %35 : vector<2x256xf32>
    %37 = arith.addf %21, %36 : vector<2x256xf32>
    %cst_32 = arith.constant 1.000000e+00 : f32
    %38 = vector.broadcast %cst_32 : f32 to vector<2x256xf32>
    %39 = arith.mulf %37, %38 : vector<2x256xf32>
    %40 = arith.negf %39 : vector<2x256xf32>
    %41 = math.exp %40 : vector<2x256xf32>
    %cst_33 = arith.constant 1.000000e+00 : f32
    %42 = vector.broadcast %cst_33 : f32 to vector<2x256xf32>
    %43 = arith.addf %42, %41 : vector<2x256xf32>
    %44 = arith.divf %42, %43 : vector<2x256xf32>
    %cst_34 = arith.constant dense<0.000000e+00> : vector<16x32xf32>
    %45 = tpu.matmul %0, %17, %cst_34 {dimension_numbers = #tpu.dot_dimension_numbers<[1], [0], [0], [1], [0, 0, 1, 1], [], []>} : vector<16x16xf32>, vector<16x32xf32>, vector<16x32xf32> -> vector<16x32xf32>
    %46 = vector.extract_strided_slice %11 {offsets = [0, 0], sizes = [32, 32], strides = [1, 1]} : vector<32x64xf32> to vector<32x32xf32>
    %cst_35 = arith.constant dense<0.000000e+00> : vector<16x32xf32>
    %47 = tpu.matmul %45, %46, %cst_35 {dimension_numbers = #tpu.dot_dimension_numbers<[1], [0], [0], [1], [0, 0, 1, 1], [], []>} : vector<16x32xf32>, vector<32x32xf32>, vector<16x32xf32> -> vector<16x32xf32>
    %48 = vector.extract_strided_slice %12 {offsets = [0, 0], sizes = [1, 32], strides = [1, 1]} : vector<1x64xf32> to vector<1x32xf32>
    %49 = vector.broadcast %48 : vector<1x32xf32> to vector<16x32xf32>
    %50 = arith.addf %47, %49 : vector<16x32xf32>
    %cst_36 = arith.constant 0.000000e+00 : f32
    %51 = vector.broadcast %cst_36 : f32 to vector<16x32xf32>
    %52 = arith.maximumf %50, %51 : vector<16x32xf32>
    %53 = vector.extract_strided_slice %13 {offsets = [0, 0], sizes = [1, 32], strides = [1, 1]} : vector<1x64xf32> to vector<1x32xf32>
    %54 = vector.broadcast %53 : vector<1x32xf32> to vector<16x32xf32>
    %55 = arith.mulf %52, %54 : vector<16x32xf32>
    %cst_37 = arith.constant dense<0.000000e+00> : vector<16xf32>
    %56 = vector.multi_reduction <add>, %55, %cst_37 [1] : vector<16x32xf32> to vector<16xf32>
    %57 = vector.shape_cast %56 : vector<16xf32> to vector<16x1xf32>
    %58 = vector.extract_strided_slice %14 {offsets = [0, 0], sizes = [1, 1], strides = [1, 1]} : vector<1x2xf32> to vector<1x1xf32>
    %59 = vector.broadcast %58 : vector<1x1xf32> to vector<16x1xf32>
    %60 = arith.addf %57, %59 : vector<16x1xf32>
    %61 = vector.extract_strided_slice %23 {offsets = [0, 0], sizes = [16, 1], strides = [1, 1]} : vector<16x2xf32> to vector<16x1xf32>
    %62 = arith.addf %61, %60 : vector<16x1xf32>
    %cst_38 = arith.constant 1.000000e+00 : f32
    %63 = vector.broadcast %cst_38 : f32 to vector<16x1xf32>
    %64 = arith.mulf %62, %63 : vector<16x1xf32>
    %65 = arith.negf %64 : vector<16x1xf32>
    %66 = math.exp %65 : vector<16x1xf32>
    %cst_39 = arith.constant 1.000000e+00 : f32
    %67 = vector.broadcast %cst_39 : f32 to vector<16x1xf32>
    %68 = arith.addf %67, %66 : vector<16x1xf32>
    %69 = arith.divf %67, %68 : vector<16x1xf32>
    %cst_40 = arith.constant dense<0.000000e+00> : vector<16x32xf32>
    %70 = tpu.matmul %0, %45, %cst_40 {dimension_numbers = #tpu.dot_dimension_numbers<[1], [0], [0], [1], [0, 0, 1, 1], [], []>} : vector<16x16xf32>, vector<16x32xf32>, vector<16x32xf32> -> vector<16x32xf32>
    %71 = vector.extract_strided_slice %11 {offsets = [0, 32], sizes = [32, 32], strides = [1, 1]} : vector<32x64xf32> to vector<32x32xf32>
    %cst_41 = arith.constant dense<0.000000e+00> : vector<16x32xf32>
    %72 = tpu.matmul %70, %71, %cst_41 {dimension_numbers = #tpu.dot_dimension_numbers<[1], [0], [0], [1], [0, 0, 1, 1], [], []>} : vector<16x32xf32>, vector<32x32xf32>, vector<16x32xf32> -> vector<16x32xf32>
    %73 = vector.extract_strided_slice %12 {offsets = [0, 32], sizes = [1, 32], strides = [1, 1]} : vector<1x64xf32> to vector<1x32xf32>
    %74 = vector.broadcast %73 : vector<1x32xf32> to vector<16x32xf32>
    %75 = arith.addf %72, %74 : vector<16x32xf32>
    %cst_42 = arith.constant 0.000000e+00 : f32
    %76 = vector.broadcast %cst_42 : f32 to vector<16x32xf32>
    %77 = arith.maximumf %75, %76 : vector<16x32xf32>
    %78 = vector.extract_strided_slice %13 {offsets = [0, 32], sizes = [1, 32], strides = [1, 1]} : vector<1x64xf32> to vector<1x32xf32>
    %79 = vector.broadcast %78 : vector<1x32xf32> to vector<16x32xf32>
    %80 = arith.mulf %77, %79 : vector<16x32xf32>
    %cst_43 = arith.constant dense<0.000000e+00> : vector<16xf32>
    %81 = vector.multi_reduction <add>, %80, %cst_43 [1] : vector<16x32xf32> to vector<16xf32>
    %82 = vector.shape_cast %81 : vector<16xf32> to vector<16x1xf32>
    %83 = vector.extract_strided_slice %14 {offsets = [0, 1], sizes = [1, 1], strides = [1, 1]} : vector<1x2xf32> to vector<1x1xf32>
    %84 = vector.broadcast %83 : vector<1x1xf32> to vector<16x1xf32>
    %85 = arith.addf %82, %84 : vector<16x1xf32>
    %86 = vector.extract_strided_slice %23 {offsets = [0, 1], sizes = [16, 1], strides = [1, 1]} : vector<16x2xf32> to vector<16x1xf32>
    %87 = arith.addf %86, %85 : vector<16x1xf32>
    %cst_44 = arith.constant 1.000000e+00 : f32
    %88 = vector.broadcast %cst_44 : f32 to vector<16x1xf32>
    %89 = arith.mulf %87, %88 : vector<16x1xf32>
    %90 = arith.negf %89 : vector<16x1xf32>
    %91 = math.exp %90 : vector<16x1xf32>
    %cst_45 = arith.constant 1.000000e+00 : f32
    %92 = vector.broadcast %cst_45 : f32 to vector<16x1xf32>
    %93 = arith.addf %92, %91 : vector<16x1xf32>
    %94 = arith.divf %92, %93 : vector<16x1xf32>
    %95 = vector.extract_strided_slice %44 {offsets = [0, 0], sizes = [1, 256], strides = [1, 1]} : vector<2x256xf32> to vector<1x256xf32>
    %96 = arith.mulf %15, %95 : vector<1x256xf32>
    %97 = vector.broadcast %96 : vector<1x256xf32> to vector<16x256xf32>
    %98 = arith.mulf %3, %97 : vector<16x256xf32>
    %cst_46 = arith.constant dense<0.000000e+00> : vector<16x16xf32>
    %99 = tpu.matmul %98, %4, %cst_46 {dimension_numbers = #tpu.dot_dimension_numbers<[1], [1], [0], [0], [0, 0, 1, 0], [], []>} : vector<16x256xf32>, vector<16x256xf32>, vector<16x16xf32> -> vector<16x16xf32>
    %cst_47 = arith.constant dense<0.000000e+00> : vector<16x32xf32>
    %100 = tpu.matmul %99, %17, %cst_47 {dimension_numbers = #tpu.dot_dimension_numbers<[1], [0], [0], [1], [0, 0, 1, 1], [], []>} : vector<16x16xf32>, vector<16x32xf32>, vector<16x32xf32> -> vector<16x32xf32>
    %101 = arith.addf %17, %100 : vector<16x32xf32>
    %102 = vector.extract_strided_slice %44 {offsets = [1, 0], sizes = [1, 256], strides = [1, 1]} : vector<2x256xf32> to vector<1x256xf32>
    %103 = arith.mulf %15, %102 : vector<1x256xf32>
    %104 = vector.broadcast %103 : vector<1x256xf32> to vector<16x256xf32>
    %105 = arith.mulf %3, %104 : vector<16x256xf32>
    %cst_48 = arith.constant dense<0.000000e+00> : vector<16x16xf32>
    %106 = tpu.matmul %105, %4, %cst_48 {dimension_numbers = #tpu.dot_dimension_numbers<[1], [1], [0], [0], [0, 0, 1, 0], [], []>} : vector<16x256xf32>, vector<16x256xf32>, vector<16x16xf32> -> vector<16x16xf32>
    %cst_49 = arith.constant dense<0.000000e+00> : vector<16x32xf32>
    %107 = tpu.matmul %106, %100, %cst_49 {dimension_numbers = #tpu.dot_dimension_numbers<[1], [0], [0], [1], [0, 0, 1, 1], [], []>} : vector<16x16xf32>, vector<16x32xf32>, vector<16x32xf32> -> vector<16x32xf32>
    %108 = arith.addf %101, %107 : vector<16x32xf32>
    %cst_50 = arith.constant 0.000000e+00 : f32
    %109 = vector.broadcast %cst_50 : f32 to vector<1x1xf32>
    %cst_51 = arith.constant dense<0.000000e+00> : vector<16x32xf32>
    %110 = tpu.matmul %1, %17, %cst_51 {dimension_numbers = #tpu.dot_dimension_numbers<[1], [0], [0], [1], [0, 0, 1, 1], [], []>} : vector<16x16xf32>, vector<16x32xf32>, vector<16x32xf32> -> vector<16x32xf32>
    %111 = vector.broadcast %69 : vector<16x1xf32> to vector<16x32xf32>
    %112 = arith.mulf %111, %17 : vector<16x32xf32>
    %cst_52 = arith.constant 1.000000e+00 : f32
    %113 = vector.broadcast %cst_52 : f32 to vector<16x1xf32>
    %114 = arith.subf %113, %69 : vector<16x1xf32>
    %115 = vector.broadcast %114 : vector<16x1xf32> to vector<16x32xf32>
    %116 = arith.mulf %115, %110 : vector<16x32xf32>
    %117 = arith.addf %112, %116 : vector<16x32xf32>
    %cst_53 = arith.constant dense<0.000000e+00> : vector<16x32xf32>
    %118 = tpu.matmul %0, %117, %cst_53 {dimension_numbers = #tpu.dot_dimension_numbers<[1], [0], [0], [1], [0, 0, 1, 1], [], []>} : vector<16x16xf32>, vector<16x32xf32>, vector<16x32xf32> -> vector<16x32xf32>
    %119 = arith.addf %17, %118 : vector<16x32xf32>
    %cst_54 = arith.constant dense<0.000000e+00> : vector<1xf32>
    %120 = vector.multi_reduction <add>, %69, %cst_54 [0] : vector<16x1xf32> to vector<1xf32>
    %121 = vector.shape_cast %120 : vector<1xf32> to vector<1x1xf32>
    %cst_55 = arith.constant 6.250000e-02 : f32
    %122 = vector.broadcast %cst_55 : f32 to vector<1x1xf32>
    %123 = arith.mulf %121, %122 : vector<1x1xf32>
    %124 = arith.addf %109, %123 : vector<1x1xf32>
    %cst_56 = arith.constant dense<0.000000e+00> : vector<16x32xf32>
    %125 = tpu.matmul %1, %118, %cst_56 {dimension_numbers = #tpu.dot_dimension_numbers<[1], [0], [0], [1], [0, 0, 1, 1], [], []>} : vector<16x16xf32>, vector<16x32xf32>, vector<16x32xf32> -> vector<16x32xf32>
    %126 = vector.broadcast %94 : vector<16x1xf32> to vector<16x32xf32>
    %127 = arith.mulf %126, %118 : vector<16x32xf32>
    %cst_57 = arith.constant 1.000000e+00 : f32
    %128 = vector.broadcast %cst_57 : f32 to vector<16x1xf32>
    %129 = arith.subf %128, %94 : vector<16x1xf32>
    %130 = vector.broadcast %129 : vector<16x1xf32> to vector<16x32xf32>
    %131 = arith.mulf %130, %125 : vector<16x32xf32>
    %132 = arith.addf %127, %131 : vector<16x32xf32>
    %cst_58 = arith.constant dense<0.000000e+00> : vector<16x32xf32>
    %133 = tpu.matmul %0, %132, %cst_58 {dimension_numbers = #tpu.dot_dimension_numbers<[1], [0], [0], [1], [0, 0, 1, 1], [], []>} : vector<16x16xf32>, vector<16x32xf32>, vector<16x32xf32> -> vector<16x32xf32>
    %134 = arith.addf %119, %133 : vector<16x32xf32>
    %cst_59 = arith.constant dense<0.000000e+00> : vector<1xf32>
    %135 = vector.multi_reduction <add>, %94, %cst_59 [0] : vector<16x1xf32> to vector<1xf32>
    %136 = vector.shape_cast %135 : vector<1xf32> to vector<1x1xf32>
    %cst_60 = arith.constant 6.250000e-02 : f32
    %137 = vector.broadcast %cst_60 : f32 to vector<1x1xf32>
    %138 = arith.mulf %136, %137 : vector<1x1xf32>
    %139 = arith.addf %124, %138 : vector<1x1xf32>
    %cst_61 = arith.constant 5.000000e-01 : f32
    %140 = vector.broadcast %cst_61 : f32 to vector<1x1xf32>
    %141 = arith.mulf %139, %140 : vector<1x1xf32>
    %cst_62 = arith.constant 0.333333343 : f32
    %142 = vector.broadcast %cst_62 : f32 to vector<16x32xf32>
    %143 = arith.mulf %108, %142 : vector<16x32xf32>
    %cst_63 = arith.constant 0.333333343 : f32
    %144 = vector.broadcast %cst_63 : f32 to vector<16x32xf32>
    %145 = arith.mulf %134, %144 : vector<16x32xf32>
    %146 = tpu.concatenate %143, %145 in 1 : vector<16x32xf32>, vector<16x32xf32> -> vector<16x64xf32>
    %cst_64 = arith.constant 0.000000e+00 : f32
    %147 = vector.broadcast %cst_64 : f32 to vector<16x64xf32>
    %148 = vector.broadcast %141 : vector<1x1xf32> to vector<16x64xf32>
    %149 = arith.addf %147, %148 : vector<16x64xf32>
    %cst_65 = arith.constant 0.000000e+00 : f32
    %150 = vector.broadcast %cst_65 : f32 to vector<16x256xf32>
    %151 = vector.extract_strided_slice %44 {offsets = [1, 0], sizes = [1, 256], strides = [1, 1]} : vector<2x256xf32> to vector<1x256xf32>
    %152 = vector.broadcast %151 : vector<1x256xf32> to vector<16x256xf32>
    %153 = arith.addf %150, %152 : vector<16x256xf32>
    %154 = tpu.concatenate %146, %149, %153 in 1 : vector<16x64xf32>, vector<16x64xf32>, vector<16x256xf32> -> vector<16x384xf32>
    %c0_66 = arith.constant 0 : index
    %c0_67 = arith.constant 0 : index
    %c0_68 = arith.constant 0 : index
    %155 = vector.load %arg8[%c0_66, %c0_67, %c0_68] : memref<1x16x384xf32, #tpu.memory_space<vmem>>, vector<1x16x384xf32>
    %156 = vector.shape_cast %155 : vector<1x16x384xf32> to vector<16x384xf32>
    %157 = vector.shape_cast %154 : vector<16x384xf32> to vector<1x16x384xf32>
    tpu.vector_store %arg8[%c0_66, %c0_67, %c0_68], %157 {strides = array<i32>} : memref<1x16x384xf32, #tpu.memory_space<vmem>>, vector<1x16x384xf32>,
    return
  }
  func.func @transform_0(%arg0: i32) -> (i32, i32) {
    %c0_i32 = arith.constant 0 : i32
    %c0_i32_0 = arith.constant 0 : i32
    %c0_i32_1 = arith.constant 0 : i32
    return %c0_i32, %c0_i32_0 : i32, i32
  }
  func.func @transform_1(%arg0: i32) -> (i32, i32) {
    %c0_i32 = arith.constant 0 : i32
    %c0_i32_0 = arith.constant 0 : i32
    %c0_i32_1 = arith.constant 0 : i32
    return %c0_i32, %c0_i32_0 : i32, i32
  }
  func.func @transform_2(%arg0: i32) -> (i32, i32) {
    %c0_i32 = arith.constant 0 : i32
    %c0_i32_0 = arith.constant 0 : i32
    %c0_i32_1 = arith.constant 0 : i32
    return %c0_i32, %c0_i32_0 : i32, i32
  }
  func.func @transform_3(%arg0: i32) -> (i32, i32, i32) {
    %c0_i32 = arith.constant 0 : i32
    %c0_i32_0 = arith.constant 0 : i32
    %c0_i32_1 = arith.constant 0 : i32
    return %arg0, %c0_i32, %c0_i32_0 : i32, i32, i32
  }
  func.func @transform_4(%arg0: i32) -> (i32, i32, i32) {
    %c0_i32 = arith.constant 0 : i32
    %c0_i32_0 = arith.constant 0 : i32
    %c0_i32_1 = arith.constant 0 : i32
    return %arg0, %c0_i32, %c0_i32_0 : i32, i32, i32
  }
  func.func @transform_5(%arg0: i32) -> (i32, i32, i32) {
    %c0_i32 = arith.constant 0 : i32
    %c0_i32_0 = arith.constant 0 : i32
    %c0_i32_1 = arith.constant 0 : i32
    return %arg0, %c0_i32, %c0_i32_0 : i32, i32, i32
  }
  func.func @transform_6(%arg0: i32) -> (i32, i32, i32) {
    %c0_i32 = arith.constant 0 : i32
    %c0_i32_0 = arith.constant 0 : i32
    %c0_i32_1 = arith.constant 0 : i32
    return %arg0, %c0_i32, %c0_i32_0 : i32, i32, i32
  }
  func.func @transform_7(%arg0: i32) -> (i32, i32, i32) {
    %c0_i32 = arith.constant 0 : i32
    %c0_i32_0 = arith.constant 0 : i32
    %c0_i32_1 = arith.constant 0 : i32
    return %arg0, %c0_i32, %c0_i32_0 : i32, i32, i32
  }
}

</mosaic_0001>

<llo_original>
// kernel: normalgraph_ib_forward.1
$region0: #{normalgraph_ib_forward.1}
  #allocation0 [shape = 'u32[]', space=smem, size = 0x4, offset = 0x4, fixed_abs, tag = 'smem constant byte address 0x4 - core index']
  #allocation1 [shape = 'u32[72,128]{1,0:T(1,128)}', space=vmem, size = 0x9000, scoped, tag = 'internal scratch']
  %s0 = inlined_call_operand.hbm [shape: f32[16,768], index: 0, kind: input, shape index: {}]
  %s1 = inlined_call_operand.vmem [shape: f32[72,256], index: 1, kind: input, shape index: {}]
  %s2 = inlined_call_operand.hbm [shape: f32[40,256], index: 2, kind: input, shape index: {}]
  %s3 = inlined_call_operand.vmem [shape: f32[4,16,32], index: 3, kind: input, shape index: {}]
  %s4 = inlined_call_operand.vmem [shape: f32[4,32,16], index: 4, kind: input, shape index: {}]
  %s5 = inlined_call_operand.vmem [shape: f32[4,2,256], index: 5, kind: input, shape index: {}]
  %s6 = inlined_call_operand.vmem [shape: f32[4,16,2], index: 6, kind: input, shape index: {}]
  %s7 = inlined_call_operand.vmem [shape: f32[4,16,384], index: 7, kind: output, shape index: {}]
  %s8 = sld [smem:[#allocation0]]
  $region69: #{normalgraph_ib_forward.1} parent=0
    _
  %s10 = ssub.s32 1, %s8
  %s11 = scalar_select 0, %s10, %s8
  $region1: #{normalgraph_ib_forward.1} parent=0
    #allocation2 [shape = 'u8[49152]{0}', space=vmem, size = 0xc000, scoped, tag = 'input window, operand 0, single buffered']
    #allocation3 [shape = 's32[2]{0}', space=sflag, size = 0x8, scoped, tag = 'scoped memory for normalgraph_ib_forward.1']
    #allocation4 [shape = 'u8[40960]{0}', space=vmem, size = 0xa000, scoped, tag = 'input window, operand 2, single buffered']
    #allocation5 [shape = 's32[1]{0}', space=sflag, size = 0x4, scoped, tag = 'scoped memory for normalgraph_ib_forward.1']
    %12 = vsyncpa [#allocation3], 0
    %13 = vsyncpa [#allocation5], 0
    loop: start=0, step=1, limit=6
    $region2: #{normalgraph_ib_forward.1} parent=1 // loop_pre_header
      _
    $region3: #{normalgraph_ib_forward.1} parent=1 // loop_header
      %s15 = sphi 0, %s19
      %p16 = scmp.ge.s32.totalorder %s15, 6
      %s23 = sphi 0, %s23
      %s25 = sphi 0, %s23
      %s26 = sphi 0, %s25
      %s40 = sphi 0, %s26
      %s44 = sphi 0, %s44
      %s46 = sphi 0, %s44
      %s47 = sphi 0, %s46
      %s61 = sphi 0, %s47
      %s65 = sphi 0, %s65
      %s67 = sphi 0, %s65
      %s68 = sphi 0, %s67
      %s82 = sphi 0, %s68
      %s88 = sphi 0, %s90
      %s91 = sphi 0, %s88
      %s92 = sphi 0, %s91
      %s108 = sphi 0, %s92
      %s114 = sphi 0, %s116
      %s117 = sphi 0, %s114
      %s118 = sphi 0, %s117
      %s134 = sphi 0, %s118
      %s140 = sphi 0, %s142
      %s143 = sphi 0, %s140
      %s144 = sphi 0, %s143
      %s160 = sphi 0, %s144
      %s166 = sphi 0, %s168
      %s169 = sphi 0, %s166
      %s170 = sphi 0, %s169
      %s186 = sphi 0, %s170
      %s192 = sphi 0, %s194
      %s195 = sphi 0, %s192
      %s196 = sphi 0, %s195
      %s212 = sphi 0, %s196
    $region4: #{normalgraph_ib_forward.1} parent=1 // loop_header_branch
      %18 = sbr.rel (%p16) target = $region8
    $region5: #{normalgraph_ib_forward.1} parent=1 // loop_body
      %s20 = ssub.s32 %s15, 1
      %s21 = ssub.s32 %s15, 2
      %s22 = sadd.s32 %s15, 1
      %s24 = sadd.s32 %s23, 1
      %p27 = scmp.eq.s32.totalorder %s15, 3
      %p28 = scmp.ne.s32.totalorder %s23, %s25
      %p29 = scmp.eq.s32.totalorder %s15, 0
      %p30 = por %p28, %p29
      %p31 = scmp.ne.s32.totalorder %s23, %s25
      %p32 = scmp.eq.s32.totalorder %s20, 3
      %p33 = por %p31, %p32
      %p34 = scmp.ne.s32.totalorder %s25, %s26
      %p35 = scmp.eq.s32.totalorder %s20, 0
      %p36 = por %p34, %p35
      %p37 = scmp.ne.s32.totalorder %s25, %s26
      %p38 = scmp.eq.s32.totalorder %s21, 3
      %p39 = por %p37, %p38
      %p41 = scmp.ne.s32.totalorder %s26, %s40
      %p42 = scmp.eq.s32.totalorder %s21, 0
      %p43 = por %p41, %p42
      %s45 = sadd.s32 %s44, 1
      %p48 = scmp.eq.s32.totalorder %s15, 3
      %p49 = scmp.ne.s32.totalorder %s44, %s46
      %p50 = scmp.eq.s32.totalorder %s15, 0
      %p51 = por %p49, %p50
      %p52 = scmp.ne.s32.totalorder %s44, %s46
      %p53 = scmp.eq.s32.totalorder %s20, 3
      %p54 = por %p52, %p53
      %p55 = scmp.ne.s32.totalorder %s46, %s47
      %p56 = scmp.eq.s32.totalorder %s20, 0
      %p57 = por %p55, %p56
      %p58 = scmp.ne.s32.totalorder %s46, %s47
      %p59 = scmp.eq.s32.totalorder %s21, 3
      %p60 = por %p58, %p59
      %p62 = scmp.ne.s32.totalorder %s47, %s61
      %p63 = scmp.eq.s32.totalorder %s21, 0
      %p64 = por %p62, %p63
      %s66 = sadd.s32 %s65, 1
      %p69 = scmp.eq.s32.totalorder %s15, 3
      %p70 = scmp.ne.s32.totalorder %s65, %s67
      %p71 = scmp.eq.s32.totalorder %s15, 0
      %p72 = por %p70, %p71
      %p73 = scmp.ne.s32.totalorder %s65, %s67
      %p74 = scmp.eq.s32.totalorder %s20, 3
      %p75 = por %p73, %p74
      %p76 = scmp.ne.s32.totalorder %s67, %s68
      %p77 = scmp.eq.s32.totalorder %s20, 0
      %p78 = por %p76, %p77
      %p79 = scmp.ne.s32.totalorder %s67, %s68
      %p80 = scmp.eq.s32.totalorder %s21, 3
      %p81 = por %p79, %p80
      %p83 = scmp.ne.s32.totalorder %s68, %s82
      %p84 = scmp.eq.s32.totalorder %s21, 0
      %p85 = por %p83, %p84
      %s86 = ssub.s32 %s15, %s22
      %p87 = scmp.eq.s32.totalorder %s86, 0
      %s89 = sadd.s32 %s88, 1
      %s90 = scalar_select %p87, %s88, %s89
      %p93 = pneg %p87
      %p94 = scmp.eq.s32.totalorder %s15, 3
      %p95 = por %p93, %p94
      %p96 = scmp.ne.s32.totalorder %s88, %s91
      %p97 = scmp.eq.s32.totalorder %s15, 0
      %p98 = por %p96, %p97
      %p99 = scmp.ne.s32.totalorder %s88, %s91
      %p100 = scmp.eq.s32.totalorder %s20, 3
      %p101 = por %p99, %p100
      %p102 = scmp.ne.s32.totalorder %s91, %s92
      %p103 = scmp.eq.s32.totalorder %s20, 0
      %p104 = por %p102, %p103
      %p105 = scmp.ne.s32.totalorder %s91, %s92
      %p106 = scmp.eq.s32.totalorder %s21, 3
      %p107 = por %p105, %p106
      %p109 = scmp.ne.s32.totalorder %s92, %s108
      %p110 = scmp.eq.s32.totalorder %s21, 0
      %p111 = por %p109, %p110
      %s112 = ssub.s32 %s15, %s22
      %p113 = scmp.eq.s32.totalorder %s112, 0
      %s115 = sadd.s32 %s114, 1
      %s116 = scalar_select %p113, %s114, %s115
      %p119 = pneg %p113
      %p120 = scmp.eq.s32.totalorder %s15, 3
      %p121 = por %p119, %p120
      %p122 = scmp.ne.s32.totalorder %s114, %s117
      %p123 = scmp.eq.s32.totalorder %s15, 0
      %p124 = por %p122, %p123
      %p125 = scmp.ne.s32.totalorder %s114, %s117
      %p126 = scmp.eq.s32.totalorder %s20, 3
      %p127 = por %p125, %p126
      %p128 = scmp.ne.s32.totalorder %s117, %s118
      %p129 = scmp.eq.s32.totalorder %s20, 0
      %p130 = por %p128, %p129
      %p131 = scmp.ne.s32.totalorder %s117, %s118
      %p132 = scmp.eq.s32.totalorder %s21, 3
      %p133 = por %p131, %p132
      %p135 = scmp.ne.s32.totalorder %s118, %s134
      %p136 = scmp.eq.s32.totalorder %s21, 0
      %p137 = por %p135, %p136
      %s138 = ssub.s32 %s15, %s22
      %p139 = scmp.eq.s32.totalorder %s138, 0
      %s141 = sadd.s32 %s140, 1
      %s142 = scalar_select %p139, %s140, %s141
      %p145 = pneg %p139
      %p146 = scmp.eq.s32.totalorder %s15, 3
      %p147 = por %p145, %p146
      %p148 = scmp.ne.s32.totalorder %s140, %s143
      %p149 = scmp.eq.s32.totalorder %s15, 0
      %p150 = por %p148, %p149
      %p151 = scmp.ne.s32.totalorder %s140, %s143
      %p152 = scmp.eq.s32.totalorder %s20, 3
      %p153 = por %p151, %p152
      %p154 = scmp.ne.s32.totalorder %s143, %s144
      %p155 = scmp.eq.s32.totalorder %s20, 0
      %p156 = por %p154, %p155
      %p157 = scmp.ne.s32.totalorder %s143, %s144
      %p158 = scmp.eq.s32.totalorder %s21, 3
      %p159 = por %p157, %p158
      %p161 = scmp.ne.s32.totalorder %s144, %s160
      %p162 = scmp.eq.s32.totalorder %s21, 0
      %p163 = por %p161, %p162
      %s164 = ssub.s32 %s15, %s22
      %p165 = scmp.eq.s32.totalorder %s164, 0
      %s167 = sadd.s32 %s166, 1
      %s168 = scalar_select %p165, %s166, %s167
      %p171 = pneg %p165
      %p172 = scmp.eq.s32.totalorder %s15, 3
      %p173 = por %p171, %p172
      %p174 = scmp.ne.s32.totalorder %s166, %s169
      %p175 = scmp.eq.s32.totalorder %s15, 0
      %p176 = por %p174, %p175
      %p177 = scmp.ne.s32.totalorder %s166, %s169
      %p178 = scmp.eq.s32.totalorder %s20, 3
      %p179 = por %p177, %p178
      %p180 = scmp.ne.s32.totalorder %s169, %s170
      %p181 = scmp.eq.s32.totalorder %s20, 0
      %p182 = por %p180, %p181
      %p183 = scmp.ne.s32.totalorder %s169, %s170
      %p184 = scmp.eq.s32.totalorder %s21, 3
      %p185 = por %p183, %p184
      %p187 = scmp.ne.s32.totalorder %s170, %s186
      %p188 = scmp.eq.s32.totalorder %s21, 0
      %p189 = por %p187, %p188
      %s190 = ssub.s32 %s15, %s22
      %p191 = scmp.eq.s32.totalorder %s190, 0
      %s193 = sadd.s32 %s192, 1
      %s194 = scalar_select %p191, %s192, %s193
      %p197 = pneg %p191
      %p198 = scmp.eq.s32.totalorder %s15, 3
      %p199 = por %p197, %p198
      %p200 = scmp.ne.s32.totalorder %s192, %s195
      %p201 = scmp.eq.s32.totalorder %s15, 0
      %p202 = por %p200, %p201
      %p203 = scmp.ne.s32.totalorder %s192, %s195
      %p204 = scmp.eq.s32.totalorder %s20, 3
      %p205 = por %p203, %p204
      %p206 = scmp.ne.s32.totalorder %s195, %s196
      %p207 = scmp.eq.s32.totalorder %s20, 0
      %p208 = por %p206, %p207
      %p209 = scmp.ne.s32.totalorder %s195, %s196
      %p210 = scmp.eq.s32.totalorder %s21, 3
      %p211 = por %p209, %p210
      %p213 = scmp.ne.s32.totalorder %s196, %s212
      %p214 = scmp.eq.s32.totalorder %s21, 0
      %p215 = por %p213, %p214
      %p216 = scmp.le.s32.totalorder 1, %s15
      %p217 = scmp.lt.s32.totalorder %s15, 5
      %p218 = pnand %p216, %p217
      %p219 = pneg %p218
      // Predicated region
      $region9: #{normalgraph_ib_forward.1} parent=5 // pred_check
        _
      $region10: #{normalgraph_ib_forward.1} parent=5 // pred_check_branch
        %221 = sbr.rel (%p218) target = $region12
      $region11: #{normalgraph_ib_forward.1} parent=5 // pred_region
        %s222 = ssub.s32 %s15, 1
        // Predicated region
        $region13: #{normalgraph_ib_forward.1} parent=11 // pred_check
          %p223 = pneg %p36
        $region14: #{normalgraph_ib_forward.1} parent=11 // pred_check_branch
          %225 = sbr.rel (%p223) target = $region16
        $region15: #{normalgraph_ib_forward.1} parent=11 // pred_region
          %227 = vsyncadd [#allocation3], 0
          %s228 = sshll.u32 %s0, 4
          %s229 = int_to_ptr.hbm [resolvable:$true] %s228
          %s230 = sshll.u32 [#allocation2], 4
          %s231 = int_to_ptr.vmem [resolvable:$true] %s230
          %236 = dma.hbm_to_vmem [thread:$0]  %s229, 1536, %s231, [#allocation3], 768, 768, 48
        $region16: #{normalgraph_ib_forward.1} parent=11 // pred_fallthru
          _
        // Predicated region
        $region17: #{normalgraph_ib_forward.1} parent=11 // pred_check
          %p237 = pneg %p57
        $region18: #{normalgraph_ib_forward.1} parent=11 // pred_check_branch
          %239 = sbr.rel (%p237) target = $region20
        $region19: #{normalgraph_ib_forward.1} parent=11 // pred_region
          _
        $region20: #{normalgraph_ib_forward.1} parent=11 // pred_fallthru
          _
        // Predicated region
        $region21: #{normalgraph_ib_forward.1} parent=11 // pred_check
          %p240 = pneg %p78
        $region22: #{normalgraph_ib_forward.1} parent=11 // pred_check_branch
          %242 = sbr.rel (%p240) target = $region24
        $region23: #{normalgraph_ib_forward.1} parent=11 // pred_region
          %244 = vsyncadd [#allocation5], 0
          %s245 = sshll.u32 %s2, 4
          %s246 = int_to_ptr.hbm [resolvable:$true] %s245
          %s247 = sshll.u32 [#allocation4], 4
          %s248 = int_to_ptr.vmem [resolvable:$true] %s247
          %253 = dma.hbm_to_vmem [thread:$0]  %s246, 1280, %s248, [#allocation5], 256, 256, 16
        $region24: #{normalgraph_ib_forward.1} parent=11 // pred_fallthru
          _
      $region12: #{normalgraph_ib_forward.1} parent=5 // pred_fallthru
        _
      %p254 = scmp.lt.s32.totalorder %s15, 4
      // Predicated region
      $region25: #{normalgraph_ib_forward.1} parent=5 // pred_check
        %p255 = pneg %p254
      $region26: #{normalgraph_ib_forward.1} parent=5 // pred_check_branch
        %257 = sbr.rel (%p255) target = $region28
      $region27: #{normalgraph_ib_forward.1} parent=5 // pred_region
        // Predicated region
        $region29: #{normalgraph_ib_forward.1} parent=27 // pred_check
          %p258 = pneg %p98
        $region30: #{normalgraph_ib_forward.1} parent=27 // pred_check_branch
          %260 = sbr.rel (%p258) target = $region32
        $region31: #{normalgraph_ib_forward.1} parent=27 // pred_region
          %p261 = scmp.lt.s32.totalorder %s15, 3
          %s262 = scalar_select %p261, %s15, 3
          %s263 = smul.addr %s262, 2
          %s264 = smul.addr %s263, 8
          %s265 = scalar_lea.vmem %s3, %s264
        $region32: #{normalgraph_ib_forward.1} parent=27 // pred_fallthru
          _
        // Predicated region
        $region33: #{normalgraph_ib_forward.1} parent=27 // pred_check
          %p266 = pneg %p124
        $region34: #{normalgraph_ib_forward.1} parent=27 // pred_check_branch
          %268 = sbr.rel (%p266) target = $region36
        $region35: #{normalgraph_ib_forward.1} parent=27 // pred_region
          %p269 = scmp.lt.s32.totalorder %s15, 3
          %s270 = scalar_select %p269, %s15, 3
          %s271 = smul.addr %s270, 4
          %s272 = smul.addr %s271, 8
          %s273 = scalar_lea.vmem %s4, %s272
        $region36: #{normalgraph_ib_forward.1} parent=27 // pred_fallthru
          _
        // Predicated region
        $region37: #{normalgraph_ib_forward.1} parent=27 // pred_check
          %p274 = pneg %p150
        $region38: #{normalgraph_ib_forward.1} parent=27 // pred_check_branch
          %276 = sbr.rel (%p274) target = $region40
        $region39: #{normalgraph_ib_forward.1} parent=27 // pred_region
          %p277 = scmp.lt.s32.totalorder %s15, 3
          %s278 = scalar_select %p277, %s15, 3
          %s279 = smul.addr %s278, 2
          %s280 = smul.addr %s279, 2
          %s281 = scalar_lea.vmem %s5, %s280
        $region40: #{normalgraph_ib_forward.1} parent=27 // pred_fallthru
          _
        // Predicated region
        $region41: #{normalgraph_ib_forward.1} parent=27 // pred_check
          %p282 = pneg %p176
        $region42: #{normalgraph_ib_forward.1} parent=27 // pred_check_branch
          %284 = sbr.rel (%p282) target = $region44
        $region43: #{normalgraph_ib_forward.1} parent=27 // pred_region
          %p285 = scmp.lt.s32.totalorder %s15, 3
          %s286 = scalar_select %p285, %s15, 3
          %s287 = smul.addr %s286, 2
          %s288 = smul.addr %s287, 8
          %s289 = scalar_lea.vmem %s6, %s288
        $region44: #{normalgraph_ib_forward.1} parent=27 // pred_fallthru
          _
      $region28: #{normalgraph_ib_forward.1} parent=5 // pred_fallthru
        _
      %p290 = scmp.le.s32.totalorder 1, %s15
      %p291 = scmp.lt.s32.totalorder %s15, 5
      %p292 = pnand %p290, %p291
      %p293 = pneg %p292
      // Predicated region
      $region45: #{normalgraph_ib_forward.1} parent=5 // pred_check
        _
      $region46: #{normalgraph_ib_forward.1} parent=5 // pred_check_branch
        %295 = sbr.rel (%p292) target = $region48
      $region47: #{normalgraph_ib_forward.1} parent=5 // pred_region
        %s296 = ssub.s32 %s15, 1
        // Predicated region
        $region49: #{normalgraph_ib_forward.1} parent=47 // pred_check
          %p297 = pneg %p36
        $region50: #{normalgraph_ib_forward.1} parent=47 // pred_check_branch
          %299 = sbr.rel (%p297) target = $region52
        $region51: #{normalgraph_ib_forward.1} parent=47 // pred_region
          %301 = dma.done [#allocation3], 1536
        $region52: #{normalgraph_ib_forward.1} parent=47 // pred_fallthru
          _
        // Predicated region
        $region53: #{normalgraph_ib_forward.1} parent=47 // pred_check
          %p302 = pneg %p78
        $region54: #{normalgraph_ib_forward.1} parent=47 // pred_check_branch
          %304 = sbr.rel (%p302) target = $region56
        $region55: #{normalgraph_ib_forward.1} parent=47 // pred_region
          %306 = dma.done [#allocation5], 1280
        $region56: #{normalgraph_ib_forward.1} parent=47 // pred_fallthru
          _
        %p307 = pneg %p36
        %p308 = pneg %p33
        %p309 = pneg %p57
        %p310 = pneg %p54
        %p311 = pneg %p78
        %p312 = pneg %p75
        %p313 = scmp.lt.s32.totalorder %s20, 3
        %s314 = scalar_select %p313, %s20, 3
        %s315 = smul.addr %s314, 2
        %s316 = smul.addr %s315, 8
        %s317 = scalar_lea.vmem %s3, %s316
        %p318 = pneg %p104
        %p319 = pneg %p101
        %p320 = scmp.lt.s32.totalorder %s20, 3
        %s321 = scalar_select %p320, %s20, 3
        %s322 = smul.addr %s321, 4
        %s323 = smul.addr %s322, 8
        %s324 = scalar_lea.vmem %s4, %s323
        %p325 = pneg %p130
        %p326 = pneg %p127
        %p327 = scmp.lt.s32.totalorder %s20, 3
        %s328 = scalar_select %p327, %s20, 3
        %s329 = smul.addr %s328, 2
        %s330 = smul.addr %s329, 2
        %s331 = scalar_lea.vmem %s5, %s330
        %p332 = pneg %p156
        %p333 = pneg %p153
        %p334 = scmp.lt.s32.totalorder %s20, 3
        %s335 = scalar_select %p334, %s20, 3
        %s336 = smul.addr %s335, 2
        %s337 = smul.addr %s336, 8
        %s338 = scalar_lea.vmem %s6, %s337
        %p339 = pneg %p182
        %p340 = pneg %p179
        %p341 = pneg %p208
        %p342 = pneg %p205
        %p343 = scmp.lt.s32.totalorder %s20, 3
        %s344 = scalar_select %p343, %s20, 3
        %s345 = smul.addr %s344, 6
        %s346 = smul.addr %s345, 8
        %s347 = scalar_lea.vmem %s7, %s346
        %p348 = scmp.lt.s32.totalorder %s20, 3
        %s349 = scalar_select %p348, %s20, 3
        %s350 = smul.addr %s349, 2
        %s351 = smul.addr %s350, 8
        %s352 = scalar_lea.vmem %s3, %s351
        %p353 = scmp.lt.s32.totalorder %s20, 3
        %s354 = scalar_select %p353, %s20, 3
        %s355 = smul.addr %s354, 4
        %s356 = smul.addr %s355, 8
        %s357 = scalar_lea.vmem %s4, %s356
        %p358 = scmp.lt.s32.totalorder %s20, 3
        %s359 = scalar_select %p358, %s20, 3
        %s360 = smul.addr %s359, 2
        %s361 = smul.addr %s360, 2
        %s362 = scalar_lea.vmem %s5, %s361
        %p363 = scmp.lt.s32.totalorder %s20, 3
        %s364 = scalar_select %p363, %s20, 3
        %s365 = smul.addr %s364, 2
        %s366 = smul.addr %s365, 8
        %s367 = scalar_lea.vmem %s6, %s366
        %p368 = scmp.lt.s32.totalorder %s20, 3
        %s369 = scalar_select %p368, %s20, 3
        %s370 = smul.addr %s369, 6
        %s371 = smul.addr %s370, 8
        %s372 = scalar_lea.vmem %s7, %s371
        %v373 = vld [vmem:[#allocation2] sm:$0xff]
        %v374 = vld [vmem:[#allocation2 + $0x30] sm:$0xff]
        %v375 = vld [vmem:[#allocation2 + $0x8] sm:$0xff]
        %v376 = vld [vmem:[#allocation2 + $0x38] sm:$0xff]
        %v377 = vld [vmem:[#allocation2 + $0x10] sm:$0xff]
        %v378 = vld [vmem:[#allocation2 + $0x18] sm:$0xff]
        %v379 = vld [vmem:[#allocation2 + $0x20] sm:$0xff]
        %v380 = vld [vmem:[#allocation2 + $0x28] sm:$0xff]
        %v381 = vld [vmem:[#allocation2 + $0x40] sm:$0xff]
        %v382 = vld [vmem:[#allocation2 + $0x48] sm:$0xff]
        %v383 = vld [vmem:[#allocation2 + $0x50] sm:$0xff]
        %v384 = vld [vmem:[#allocation2 + $0x58] sm:$0xff]
        %v385 = vld [vmem:[%s1] sm:$0xff]
        %v386 = vld [vmem:[%s1 + $0x10] sm:$0xff]
        %v387 = vld [vmem:[%s1 + $0x20] sm:$0xff]
        %v388 = vld [vmem:[%s1 + $0x30] sm:$0xff]
        %v389 = vld [vmem:[%s1 + $0x40] sm:$0xff]
        %v390 = vld [vmem:[%s1 + $0x50] sm:$0xff]
        %v391 = vld [vmem:[%s1 + $0x60] sm:$0xff]
        %v392 = vld [vmem:[%s1 + $0x70] sm:$0xff]
        %v393 = vld [vmem:[%s1 + $0x8] sm:$0xff]
        %v394 = vld [vmem:[%s1 + $0x18] sm:$0xff]
        %v395 = vld [vmem:[%s1 + $0x28] sm:$0xff]
        %v396 = vld [vmem:[%s1 + $0x38] sm:$0xff]
        %v397 = vld [vmem:[%s1 + $0x48] sm:$0xff]
        %v398 = vld [vmem:[%s1 + $0x58] sm:$0xff]
        %v399 = vld [vmem:[%s1 + $0x68] sm:$0xff]
        %v400 = vld [vmem:[%s1 + $0x78] sm:$0xff]
        %v401 = vld [vmem:[%s1 + $0x80] sm:$0x3]
        %v402 = vld [vmem:[%s1 + $0x88] sm:$0x3]
        %v403 = vld [vmem:[#allocation4] sm:$0xff]
        %v404 = vld [vmem:[#allocation4 + $0x10] sm:$0xff]
        %v405 = vld [vmem:[#allocation4 + $0x20] sm:$0xff]
        %v406 = vld [vmem:[#allocation4 + $0x30] sm:$0xff]
        %v407 = vld [vmem:[#allocation4 + $0x40] ss:$0 sm:$0xff]
        %v408 = vld [vmem:[#allocation4 + $0x41] ss:$0 sm:$0xff]
        %v409 = vld [vmem:[#allocation4 + $0x42] ss:$0 sm:$0xff]
        %s410 = scalar_lea.vmem [#allocation4], 67
        %v411 = vld [vmem:[%s410] ss:$8 sm:$0x3]
        %v412 = vld [vmem:[%s352] sm:$0xff]
        %v413 = vld [vmem:[%s352 + $0x8] sm:$0xff]
        %v414 = vld [vmem:[%s357] sm:$0xff]
        %v415 = vld [vmem:[%s357 + $0x8] sm:$0xff]
        %v416 = vld [vmem:[%s357 + $0x10] sm:$0xff]
        %v417 = vld [vmem:[%s357 + $0x18] sm:$0xff]
        %v418 = vld [vmem:[%s362] sm:$0xf]
        %v419 = vld [vmem:[%s367] sm:$0xff]
        %v420 = vld [vmem:[%s367 + $0x8] sm:$0xff]
        %vm421 = vcmask 130048
        %v423 = vsel %vm421, %v414, 0
        %v426 = vsel %vm421, %v415, 0
        %v429 = vsel %vm421, %v416, 0
        %v432 = vsel %vm421, %v417, 0
        %434 = vmatpush.msra.mxu0 0.0
        %435 = vmatpush.msra.mxu0 0.0
        %436 = vmatpush.msra.mxu0 0.0
        %437 = vmatpush.msra.mxu0 0.0
        %438 = vmatpush.msra.mxu0 0.0
        %439 = vmatpush.msra.mxu0 0.0
        %440 = vmatpush.msra.mxu0 0.0
        %441 = vmatpush.msra.mxu0 0.0
        %442 = vmatpush.msra.mxu0 0.0
        %443 = vmatpush.msra.mxu0 0.0
        %444 = vmatpush.msra.mxu0 0.0
        %445 = vmatpush.msra.mxu0 0.0
        %446 = vmatpush.msra.mxu0 0.0
        %447 = vmatpush.msra.mxu0 0.0
        %448 = vmatpush.msra.mxu0 %v381
        %449 = vmatpush.msra.mxu0 %v377
        %450 = vmatmul.f32.gmra.mxu0 %v423
        %v451 = vpop.f32.mrf.mxu0
        %v452 = vadd.f32 0.0, %v451
        %453 = vmatmul.f32.gmra.mxu0 %v426
        %v454 = vpop.f32.mrf.mxu0
        %v455 = vadd.f32 0.0, %v454
        %456 = vmatmul.f32.gmra.mxu0 %v429
        %v457 = vpop.f32.mrf.mxu0
        %v458 = vadd.f32 0.0, %v457
        %459 = vmatmul.f32.gmra.mxu0 %v432
        %v460 = vpop.f32.mrf.mxu0
        %v461 = vadd.f32 0.0, %v460
        %462 = vdwg.mxu0
        %463 = vmatpush.msra.mxu0 0.0
        %464 = vmatpush.msra.mxu0 0.0
        %465 = vmatpush.msra.mxu0 0.0
        %466 = vmatpush.msra.mxu0 0.0
        %467 = vmatpush.msra.mxu0 0.0
        %468 = vmatpush.msra.mxu0 0.0
        %469 = vmatpush.msra.mxu0 0.0
        %470 = vmatpush.msra.mxu0 0.0
        %471 = vmatpush.msra.mxu0 0.0
        %472 = vmatpush.msra.mxu0 0.0
        %473 = vmatpush.msra.mxu0 0.0
        %474 = vmatpush.msra.mxu0 0.0
        %475 = vmatpush.msra.mxu0 0.0
        %476 = vmatpush.msra.mxu0 0.0
        %477 = vmatpush.msra.mxu0 %v382
        %478 = vmatpush.msra.mxu0 %v378
        %479 = vmatmul.f32.gmra.mxu0 %v423
        %v480 = vpop.f32.mrf.mxu0
        %v481 = vadd.f32 0.0, %v480
        %482 = vmatmul.f32.gmra.mxu0 %v426
        %v483 = vpop.f32.mrf.mxu0
        %v484 = vadd.f32 0.0, %v483
        %485 = vmatmul.f32.gmra.mxu0 %v429
        %v486 = vpop.f32.mrf.mxu0
        %v487 = vadd.f32 0.0, %v486
        %488 = vmatmul.f32.gmra.mxu0 %v432
        %v489 = vpop.f32.mrf.mxu0
        %v490 = vadd.f32 0.0, %v489
        %491 = vdwg.mxu0
        %492 = vmatpush.msra.mxu0 0.0
        %493 = vmatpush.msra.mxu0 0.0
        %494 = vmatpush.msra.mxu0 0.0
        %495 = vmatpush.msra.mxu0 0.0
        %496 = vmatpush.msra.mxu0 0.0
        %497 = vmatpush.msra.mxu0 0.0
        %498 = vmatpush.msra.mxu0 0.0
        %499 = vmatpush.msra.mxu0 0.0
        %500 = vmatpush.msra.mxu0 0.0
        %501 = vmatpush.msra.mxu0 0.0
        %502 = vmatpush.msra.mxu0 0.0
        %503 = vmatpush.msra.mxu0 0.0
        %504 = vmatpush.msra.mxu0 0.0
        %505 = vmatpush.msra.mxu0 0.0
        %506 = vmatpush.msra.mxu0 %v383
        %507 = vmatpush.msra.mxu0 %v379
        %508 = vmatmul.f32.gmra.mxu0 %v423
        %v509 = vpop.f32.mrf.mxu0
        %v510 = vadd.f32 0.0, %v509
        %511 = vmatmul.f32.gmra.mxu0 %v426
        %v512 = vpop.f32.mrf.mxu0
        %v513 = vadd.f32 0.0, %v512
        %514 = vmatmul.f32.gmra.mxu0 %v429
        %v515 = vpop.f32.mrf.mxu0
        %v516 = vadd.f32 0.0, %v515
        %517 = vmatmul.f32.gmra.mxu0 %v432
        %v518 = vpop.f32.mrf.mxu0
        %v519 = vadd.f32 0.0, %v518
        %520 = vdwg.mxu0
        %521 = vmatpush.msra.mxu0 0.0
        %522 = vmatpush.msra.mxu0 0.0
        %523 = vmatpush.msra.mxu0 0.0
        %524 = vmatpush.msra.mxu0 0.0
        %525 = vmatpush.msra.mxu0 0.0
        %526 = vmatpush.msra.mxu0 0.0
        %527 = vmatpush.msra.mxu0 0.0
        %528 = vmatpush.msra.mxu0 0.0
        %529 = vmatpush.msra.mxu0 0.0
        %530 = vmatpush.msra.mxu0 0.0
        %531 = vmatpush.msra.mxu0 0.0
        %532 = vmatpush.msra.mxu0 0.0
        %533 = vmatpush.msra.mxu0 0.0
        %534 = vmatpush.msra.mxu0 0.0
        %535 = vmatpush.msra.mxu0 %v384
        %536 = vmatpush.msra.mxu0 %v380
        %537 = vmatmul.f32.gmra.mxu0 %v423
        %v538 = vpop.f32.mrf.mxu0
        %v539 = vadd.f32 0.0, %v538
        %540 = vmatmul.f32.gmra.mxu0 %v426
        %v541 = vpop.f32.mrf.mxu0
        %v542 = vadd.f32 0.0, %v541
        %543 = vmatmul.f32.gmra.mxu0 %v429
        %v544 = vpop.f32.mrf.mxu0
        %v545 = vadd.f32 0.0, %v544
        %546 = vmatmul.f32.gmra.mxu0 %v432
        %v547 = vpop.f32.mrf.mxu0
        %v548 = vadd.f32 0.0, %v547
        %549 = vdwg.mxu0
        %558 = vrot.lane.b32.xlu0 %v385, 96
        %v559 = vpop.permute.xlu0 %558
        %560 = vrot.lane.b32.xlu0 %v386, 96
        %v561 = vpop.permute.xlu0 %560
        %562 = vrot.lane.b32.xlu0 %v387, 96
        %v563 = vpop.permute.xlu0 %562
        %564 = vrot.lane.b32.xlu0 %v388, 96
        %v565 = vpop.permute.xlu0 %564
        %566 = vrot.lane.b32.xlu0 %v389, 96
        %v567 = vpop.permute.xlu0 %566
        %568 = vrot.lane.b32.xlu0 %v390, 96
        %v569 = vpop.permute.xlu0 %568
        %570 = vrot.lane.b32.xlu0 %v391, 96
        %v571 = vpop.permute.xlu0 %570
        %572 = vrot.lane.b32.xlu0 %v392, 96
        %v573 = vpop.permute.xlu0 %572
        %vm574 = vcmask 261120
        %v575 = vsel %vm574, %v559, 0
        %v577 = vsel %vm574, %v561, 0
        %v579 = vsel %vm574, %v563, 0
        %v581 = vsel %vm574, %v565, 0
        %v583 = vsel %vm574, %v567, 0
        %v585 = vsel %vm574, %v569, 0
        %v587 = vsel %vm574, %v571, 0
        %v589 = vsel %vm574, %v573, 0
        %591 = vmatpush.msra.mxu0 0.0
        %592 = vmatpush.msra.mxu0 0.0
        %593 = vmatpush.msra.mxu0 0.0
        %594 = vmatpush.msra.mxu0 0.0
        %595 = vmatpush.msra.mxu0 0.0
        %596 = vmatpush.msra.mxu0 0.0
        %597 = vmatpush.msra.mxu0 0.0
        %598 = vmatpush.msra.mxu0 0.0
        %599 = vmatpush.msra.mxu0 0.0
        %600 = vmatpush.msra.mxu0 0.0
        %601 = vmatpush.msra.mxu0 0.0
        %602 = vmatpush.msra.mxu0 0.0
        %603 = vmatpush.msra.mxu0 %v519
        %604 = vmatpush.msra.mxu0 %v516
        %605 = vmatpush.msra.mxu0 %v513
        %606 = vmatpush.msra.mxu0 %v510
        %607 = vmatmul.f32.gmra.mxu0 %v575
        %v608 = vpop.f32.mrf.mxu0
        %v609 = vadd.f32 0.0, %v608
        %610 = vmatmul.f32.gmra.mxu0 %v577
        %v611 = vpop.f32.mrf.mxu0
        %v612 = vadd.f32 0.0, %v611
        %613 = vmatmul.f32.gmra.mxu0 %v579
        %v614 = vpop.f32.mrf.mxu0
        %v615 = vadd.f32 0.0, %v614
        %616 = vmatmul.f32.gmra.mxu0 %v581
        %v617 = vpop.f32.mrf.mxu0
        %v618 = vadd.f32 0.0, %v617
        %619 = vmatmul.f32.gmra.mxu0 %v583
        %v620 = vpop.f32.mrf.mxu0
        %v621 = vadd.f32 0.0, %v620
        %622 = vmatmul.f32.gmra.mxu0 %v585
        %v623 = vpop.f32.mrf.mxu0
        %v624 = vadd.f32 0.0, %v623
        %625 = vmatmul.f32.gmra.mxu0 %v587
        %v626 = vpop.f32.mrf.mxu0
        %v627 = vadd.f32 0.0, %v626
        %628 = vmatmul.f32.gmra.mxu0 %v589
        %v629 = vpop.f32.mrf.mxu0
        %v630 = vadd.f32 0.0, %v629
        %631 = vdwg.mxu0
        %632 = vmatpush.msra.mxu0 0.0
        %633 = vmatpush.msra.mxu0 0.0
        %634 = vmatpush.msra.mxu0 0.0
        %635 = vmatpush.msra.mxu0 0.0
        %636 = vmatpush.msra.mxu0 0.0
        %637 = vmatpush.msra.mxu0 0.0
        %638 = vmatpush.msra.mxu0 0.0
        %639 = vmatpush.msra.mxu0 0.0
        %640 = vmatpush.msra.mxu0 0.0
        %641 = vmatpush.msra.mxu0 0.0
        %642 = vmatpush.msra.mxu0 0.0
        %643 = vmatpush.msra.mxu0 0.0
        %644 = vmatpush.msra.mxu0 %v548
        %645 = vmatpush.msra.mxu0 %v545
        %646 = vmatpush.msra.mxu0 %v542
        %647 = vmatpush.msra.mxu0 %v539
        %648 = vmatmul.f32.gmra.mxu0 %v575
        %v649 = vpop.f32.mrf.mxu0
        %v650 = vadd.f32 0.0, %v649
        %651 = vmatmul.f32.gmra.mxu0 %v577
        %v652 = vpop.f32.mrf.mxu0
        %v653 = vadd.f32 0.0, %v652
        %654 = vmatmul.f32.gmra.mxu0 %v579
        %v655 = vpop.f32.mrf.mxu0
        %v656 = vadd.f32 0.0, %v655
        %657 = vmatmul.f32.gmra.mxu0 %v581
        %v658 = vpop.f32.mrf.mxu0
        %v659 = vadd.f32 0.0, %v658
        %660 = vmatmul.f32.gmra.mxu0 %v583
        %v661 = vpop.f32.mrf.mxu0
        %v662 = vadd.f32 0.0, %v661
        %663 = vmatmul.f32.gmra.mxu0 %v585
        %v664 = vpop.f32.mrf.mxu0
        %v665 = vadd.f32 0.0, %v664
        %666 = vmatmul.f32.gmra.mxu0 %v587
        %v667 = vpop.f32.mrf.mxu0
        %v668 = vadd.f32 0.0, %v667
        %669 = vmatmul.f32.gmra.mxu0 %v589
        %v670 = vpop.f32.mrf.mxu0
        %v671 = vadd.f32 0.0, %v670
        %672 = vdwg.mxu0
        %v673 = vsel %vm574, %v385, 0
        %v675 = vsel %vm574, %v386, 0
        %v677 = vsel %vm574, %v387, 0
        %v679 = vsel %vm574, %v388, 0
        %v681 = vsel %vm574, %v389, 0
        %v683 = vsel %vm574, %v390, 0
        %v685 = vsel %vm574, %v391, 0
        %v687 = vsel %vm574, %v392, 0
        %689 = vmatpush.msra.mxu0 0.0
        %690 = vmatpush.msra.mxu0 0.0
        %691 = vmatpush.msra.mxu0 0.0
        %692 = vmatpush.msra.mxu0 0.0
        %693 = vmatpush.msra.mxu0 0.0
        %694 = vmatpush.msra.mxu0 0.0
        %695 = vmatpush.msra.mxu0 0.0
        %696 = vmatpush.msra.mxu0 0.0
        %697 = vmatpush.msra.mxu0 0.0
        %698 = vmatpush.msra.mxu0 0.0
        %699 = vmatpush.msra.mxu0 0.0
        %700 = vmatpush.msra.mxu0 0.0
        %701 = vmatpush.msra.mxu0 %v461
        %702 = vmatpush.msra.mxu0 %v458
        %703 = vmatpush.msra.mxu0 %v455
        %704 = vmatpush.msra.mxu0 %v452
        %705 = vmatmul.f32.gmra.mxu0 %v673
        %v706 = vpop.f32.mrf.mxu0
        %v707 = vadd.f32 %v609, %v706
        %708 = vmatmul.f32.gmra.mxu0 %v675
        %v709 = vpop.f32.mrf.mxu0
        %v710 = vadd.f32 %v612, %v709
        %711 = vmatmul.f32.gmra.mxu0 %v677
        %v712 = vpop.f32.mrf.mxu0
        %v713 = vadd.f32 %v615, %v712
        %714 = vmatmul.f32.gmra.mxu0 %v679
        %v715 = vpop.f32.mrf.mxu0
        %v716 = vadd.f32 %v618, %v715
        %717 = vmatmul.f32.gmra.mxu0 %v681
        %v718 = vpop.f32.mrf.mxu0
        %v719 = vadd.f32 %v621, %v718
        %720 = vmatmul.f32.gmra.mxu0 %v683
        %v721 = vpop.f32.mrf.mxu0
        %v722 = vadd.f32 %v624, %v721
        %723 = vmatmul.f32.gmra.mxu0 %v685
        %v724 = vpop.f32.mrf.mxu0
        %v725 = vadd.f32 %v627, %v724
        %726 = vmatmul.f32.gmra.mxu0 %v687
        %v727 = vpop.f32.mrf.mxu0
        %v728 = vadd.f32 %v630, %v727
        %729 = vdwg.mxu0
        %730 = vmatpush.msra.mxu0 0.0
        %731 = vmatpush.msra.mxu0 0.0
        %732 = vmatpush.msra.mxu0 0.0
        %733 = vmatpush.msra.mxu0 0.0
        %734 = vmatpush.msra.mxu0 0.0
        %735 = vmatpush.msra.mxu0 0.0
        %736 = vmatpush.msra.mxu0 0.0
        %737 = vmatpush.msra.mxu0 0.0
        %738 = vmatpush.msra.mxu0 0.0
        %739 = vmatpush.msra.mxu0 0.0
        %740 = vmatpush.msra.mxu0 0.0
        %741 = vmatpush.msra.mxu0 0.0
        %742 = vmatpush.msra.mxu0 %v490
        %743 = vmatpush.msra.mxu0 %v487
        %744 = vmatpush.msra.mxu0 %v484
        %745 = vmatpush.msra.mxu0 %v481
        %746 = vmatmul.f32.gmra.mxu0 %v673
        %v747 = vpop.f32.mrf.mxu0
        %v748 = vadd.f32 %v650, %v747
        %749 = vmatmul.f32.gmra.mxu0 %v675
        %v750 = vpop.f32.mrf.mxu0
        %v751 = vadd.f32 %v653, %v750
        %752 = vmatmul.f32.gmra.mxu0 %v677
        %v753 = vpop.f32.mrf.mxu0
        %v754 = vadd.f32 %v656, %v753
        %755 = vmatmul.f32.gmra.mxu0 %v679
        %v756 = vpop.f32.mrf.mxu0
        %v757 = vadd.f32 %v659, %v756
        %758 = vmatmul.f32.gmra.mxu0 %v681
        %v759 = vpop.f32.mrf.mxu0
        %v760 = vadd.f32 %v662, %v759
        %761 = vmatmul.f32.gmra.mxu0 %v683
        %v762 = vpop.f32.mrf.mxu0
        %v763 = vadd.f32 %v665, %v762
        %764 = vmatmul.f32.gmra.mxu0 %v685
        %v765 = vpop.f32.mrf.mxu0
        %v766 = vadd.f32 %v668, %v765
        %767 = vmatmul.f32.gmra.mxu0 %v687
        %v768 = vpop.f32.mrf.mxu0
        %v769 = vadd.f32 %v671, %v768
        %770 = vdwg.mxu0
        %772 = vset.pattern.permute.xlu0 0
        %773 = vperm.xlu0 %772, %v393
        %v774 = vpop.permute.xlu0 %773
        %777 = vset.pattern.permute.xlu0 0
        %778 = vperm.xlu0 %777, %v394
        %v779 = vpop.permute.xlu0 %778
        %782 = vset.pattern.permute.xlu0 0
        %783 = vperm.xlu0 %782, %v395
        %v784 = vpop.permute.xlu0 %783
        %787 = vset.pattern.permute.xlu0 0
        %788 = vperm.xlu0 %787, %v396
        %v789 = vpop.permute.xlu0 %788
        %792 = vset.pattern.permute.xlu0 0
        %793 = vperm.xlu0 %792, %v397
        %v794 = vpop.permute.xlu0 %793
        %797 = vset.pattern.permute.xlu0 0
        %798 = vperm.xlu0 %797, %v398
        %v799 = vpop.permute.xlu0 %798
        %802 = vset.pattern.permute.xlu0 0
        %803 = vperm.xlu0 %802, %v399
        %v804 = vpop.permute.xlu0 %803
        %807 = vset.pattern.permute.xlu0 0
        %808 = vperm.xlu0 %807, %v400
        %v809 = vpop.permute.xlu0 %808
        %v811 = vadd.f32 %v707, %v774
        %v812 = vadd.f32 %v748, %v774
        %v813 = vadd.f32 %v710, %v779
        %v814 = vadd.f32 %v751, %v779
        %v815 = vadd.f32 %v713, %v784
        %v816 = vadd.f32 %v754, %v784
        %v817 = vadd.f32 %v716, %v789
        %v818 = vadd.f32 %v757, %v789
        %v819 = vadd.f32 %v719, %v794
        %v820 = vadd.f32 %v760, %v794
        %v821 = vadd.f32 %v722, %v799
        %v822 = vadd.f32 %v763, %v799
        %v823 = vadd.f32 %v725, %v804
        %v824 = vadd.f32 %v766, %v804
        %v825 = vadd.f32 %v728, %v809
        %v826 = vadd.f32 %v769, %v809
        %v827 = vmax.f32 %v811, 0.0
        %v828 = vmax.f32 %v812, 0.0
        %v829 = vmax.f32 %v813, 0.0
        %v830 = vmax.f32 %v814, 0.0
        %v831 = vmax.f32 %v815, 0.0
        %v832 = vmax.f32 %v816, 0.0
        %v833 = vmax.f32 %v817, 0.0
        %v834 = vmax.f32 %v818, 0.0
        %v835 = vmax.f32 %v819, 0.0
        %v836 = vmax.f32 %v820, 0.0
        %v837 = vmax.f32 %v821, 0.0
        %v838 = vmax.f32 %v822, 0.0
        %v839 = vmax.f32 %v823, 0.0
        %v840 = vmax.f32 %v824, 0.0
        %v841 = vmax.f32 %v825, 0.0
        %v842 = vmax.f32 %v826, 0.0
        %844 = vset.pattern.permute.xlu0 0
        %845 = vperm.xlu0 %844, %v402
        %v846 = vpop.permute.xlu0 %845
        %vm848 = vcmask 523264
        %v850 = vsel %vm848, %v401, 0
        %852 = vmatpush.msra.mxu0 0.0
        %853 = vmatpush.msra.mxu0 0.0
        %854 = vmatpush.msra.mxu0 0.0
        %855 = vmatpush.msra.mxu0 0.0
        %856 = vmatpush.msra.mxu0 0.0
        %857 = vmatpush.msra.mxu0 0.0
        %858 = vmatpush.msra.mxu0 0.0
        %859 = vmatpush.msra.mxu0 0.0
        %860 = vmatpush.msra.mxu0 %v841
        %861 = vmatpush.msra.mxu0 %v839
        %862 = vmatpush.msra.mxu0 %v837
        %863 = vmatpush.msra.mxu0 %v835
        %864 = vmatpush.msra.mxu0 %v833
        %865 = vmatpush.msra.mxu0 %v831
        %866 = vmatpush.msra.mxu0 %v829
        %867 = vmatpush.msra.mxu0 %v827
        %868 = vmatmul.f32.gmra.mxu0 %v850
        %v869 = vpop.f32.mrf.mxu0
        %v870 = vadd.f32 %v846, %v869
        %871 = vdwg.mxu0
        %872 = vmatpush.msra.mxu0 0.0
        %873 = vmatpush.msra.mxu0 0.0
        %874 = vmatpush.msra.mxu0 0.0
        %875 = vmatpush.msra.mxu0 0.0
        %876 = vmatpush.msra.mxu0 0.0
        %877 = vmatpush.msra.mxu0 0.0
        %878 = vmatpush.msra.mxu0 0.0
        %879 = vmatpush.msra.mxu0 0.0
        %880 = vmatpush.msra.mxu0 %v842
        %881 = vmatpush.msra.mxu0 %v840
        %882 = vmatpush.msra.mxu0 %v838
        %883 = vmatpush.msra.mxu0 %v836
        %884 = vmatpush.msra.mxu0 %v834
        %885 = vmatpush.msra.mxu0 %v832
        %886 = vmatpush.msra.mxu0 %v830
        %887 = vmatpush.msra.mxu0 %v828
        %888 = vmatmul.f32.gmra.mxu0 %v850
        %v889 = vpop.f32.mrf.mxu0
        %v890 = vadd.f32 %v846, %v889
        %891 = vdwg.mxu0
        %v894 = vrot.slane %v890, 6
        %vm895 = vcmask 1041408
        %v896 = vsel %vm895, %v870, %v894
        %v898 = vadd.f32 %v418, %v896
        %v899 = vxor.u32 %v898, 2147483648
        %v900 = vmul.f32 %v899, 1.442695
        %v901 = vpow.pop %v900
        %v902 = vadd.f32 %v901, 1.0
        %v903 = vrcp.pop %v902
        %v904 = vmul.f32 %v902, %v903
        %v905 = vsub.f32 1.0, %v904
        %v906 = vmul.f32 %v903, %v905
        %v907 = vadd.f32 %v903, %v906
        %vm908 = vweird.f32 %v902
        %vm909 = vweird.f32 %v903
        %vm910 = vmor %vm908, %vm909
        %v911 = vsel %vm910, %v903, %v907
        %v912 = vand.u32 2147483647, %v902
        %vm913 = vcmp.eq.f32.partialorder %v912, 8.507059e+37
        %v914 = vand.u32 %v902, 2147483648
        %v915 = vor.u32 1.1754944e-38, %v914
        %v916 = vsel %vm913, %v915, %v911
        %v917 = vmul.f32 1.0, %v916
        %v919 = vsel %vm421, %v373, 0
        %v922 = vsel %vm421, %v374, 0
        %924 = vmatpush.msra.mxu0 0.0
        %925 = vmatpush.msra.mxu0 0.0
        %926 = vmatpush.msra.mxu0 0.0
        %927 = vmatpush.msra.mxu0 0.0
        %928 = vmatpush.msra.mxu0 0.0
        %929 = vmatpush.msra.mxu0 0.0
        %930 = vmatpush.msra.mxu0 0.0
        %931 = vmatpush.msra.mxu0 0.0
        %932 = vmatpush.msra.mxu0 0.0
        %933 = vmatpush.msra.mxu0 0.0
        %934 = vmatpush.msra.mxu0 0.0
        %935 = vmatpush.msra.mxu0 0.0
        %936 = vmatpush.msra.mxu0 0.0
        %937 = vmatpush.msra.mxu0 0.0
        %938 = vmatpush.msra.mxu0 %v413
        %939 = vmatpush.msra.mxu0 %v412
        %940 = vmatmul.f32.gmra.mxu0 %v919
        %v941 = vpop.f32.mrf.mxu0
        %v942 = vadd.f32 0.0, %v941
        %943 = vmatmul.f32.gmra.mxu0 %v922
        %v944 = vpop.f32.mrf.mxu0
        %v945 = vadd.f32 0.0, %v944
        %946 = vdwg.mxu0
        %v948 = vsel %vm574, %v942, 0
        %v951 = vsel %vm574, %v945, 0
        %953 = vmatpush.msra.mxu0 0.0
        %954 = vmatpush.msra.mxu0 0.0
        %955 = vmatpush.msra.mxu0 0.0
        %956 = vmatpush.msra.mxu0 0.0
        %957 = vmatpush.msra.mxu0 0.0
        %958 = vmatpush.msra.mxu0 0.0
        %959 = vmatpush.msra.mxu0 0.0
        %960 = vmatpush.msra.mxu0 0.0
        %961 = vmatpush.msra.mxu0 0.0
        %962 = vmatpush.msra.mxu0 0.0
        %963 = vmatpush.msra.mxu0 0.0
        %964 = vmatpush.msra.mxu0 0.0
        %965 = vmatpush.msra.mxu0 %v406
        %966 = vmatpush.msra.mxu0 %v405
        %967 = vmatpush.msra.mxu0 %v404
        %968 = vmatpush.msra.mxu0 %v403
        %969 = vmatmul.f32.gmra.mxu0 %v948
        %v970 = vpop.f32.mrf.mxu0
        %v971 = vadd.f32 %v407, %v970
        %972 = vmatmul.f32.gmra.mxu0 %v951
        %v973 = vpop.f32.mrf.mxu0
        %v974 = vadd.f32 %v407, %v973
        %975 = vdwg.mxu0
        %v976 = vmax.f32 %v971, 0.0
        %v977 = vmax.f32 %v974, 0.0
        %v978 = vmul.f32 %v976, %v408
        %v979 = vmul.f32 %v977, %v408
        %v980 = vsel %vm574, %v978, 0.0
        %981 = vadd.xlane.f32.xlu0 %v980
        %v982 = vpop.xlane.xlu0 %981
        %v983 = vsel %vm574, %v979, 0.0
        %984 = vadd.xlane.f32.xlu0 %v983
        %v985 = vpop.xlane.xlu0 %984
        %v986 = vadd.f32 %v982, %v409
        %v987 = vadd.f32 %v985, %v409
        %v988 = vadd.f32 %v419, %v986
        %v989 = vadd.f32 %v420, %v987
        %v990 = vxor.u32 %v988, 2147483648
        %v991 = vxor.u32 %v989, 2147483648
        %v992 = vmul.f32 %v990, 1.442695
        %v993 = vpow.pop %v992
        %v994 = vmul.f32 %v991, 1.442695
        %v995 = vpow.pop %v994
        %v996 = vadd.f32 %v993, 1.0
        %v997 = vadd.f32 %v995, 1.0
        %v998 = vrcp.pop %v996
        %v999 = vmul.f32 %v996, %v998
        %v1000 = vsub.f32 1.0, %v999
        %v1001 = vmul.f32 %v998, %v1000
        %v1002 = vadd.f32 %v998, %v1001
        %vm1003 = vweird.f32 %v996
        %vm1004 = vweird.f32 %v998
        %vm1005 = vmor %vm1003, %vm1004
        %v1006 = vsel %vm1005, %v998, %v1002
        %v1007 = vand.u32 2147483647, %v996
        %vm1008 = vcmp.eq.f32.partialorder %v1007, 8.507059e+37
        %v1009 = vand.u32 %v996, 2147483648
        %v1010 = vor.u32 1.1754944e-38, %v1009
        %v1011 = vsel %vm1008, %v1010, %v1006
        %v1012 = vmul.f32 1.0, %v1011
        %v1013 = vrcp.pop %v997
        %v1014 = vmul.f32 %v997, %v1013
        %v1015 = vsub.f32 1.0, %v1014
        %v1016 = vmul.f32 %v1013, %v1015
        %v1017 = vadd.f32 %v1013, %v1016
        %vm1018 = vweird.f32 %v997
        %vm1019 = vweird.f32 %v1013
        %vm1020 = vmor %vm1018, %vm1019
        %v1021 = vsel %vm1020, %v1013, %v1017
        %v1022 = vand.u32 2147483647, %v997
        %vm1023 = vcmp.eq.f32.partialorder %v1022, 8.507059e+37
        %v1024 = vand.u32 %v997, 2147483648
        %v1025 = vor.u32 1.1754944e-38, %v1024
        %v1026 = vsel %vm1023, %v1025, %v1021
        %v1027 = vmul.f32 1.0, %v1026
        %1028 = vmatpush.msra.mxu0 0.0
        %1029 = vmatpush.msra.mxu0 0.0
        %1030 = vmatpush.msra.mxu0 0.0
        %1031 = vmatpush.msra.mxu0 0.0
        %1032 = vmatpush.msra.mxu0 0.0
        %1033 = vmatpush.msra.mxu0 0.0
        %1034 = vmatpush.msra.mxu0 0.0
        %1035 = vmatpush.msra.mxu0 0.0
        %1036 = vmatpush.msra.mxu0 0.0
        %1037 = vmatpush.msra.mxu0 0.0
        %1038 = vmatpush.msra.mxu0 0.0
        %1039 = vmatpush.msra.mxu0 0.0
        %1040 = vmatpush.msra.mxu0 0.0
        %1041 = vmatpush.msra.mxu0 0.0
        %1042 = vmatpush.msra.mxu0 %v945
        %1043 = vmatpush.msra.mxu0 %v942
        %1044 = vmatmul.f32.gmra.mxu0 %v919
        %v1045 = vpop.f32.mrf.mxu0
        %v1046 = vadd.f32 0.0, %v1045
        %1047 = vmatmul.f32.gmra.mxu0 %v922
        %v1048 = vpop.f32.mrf.mxu0
        %v1049 = vadd.f32 0.0, %v1048
        %1050 = vdwg.mxu0
        %1055 = vrot.lane.b32.xlu0 %v403, 96
        %v1056 = vpop.permute.xlu0 %1055
        %1057 = vrot.lane.b32.xlu0 %v404, 96
        %v1058 = vpop.permute.xlu0 %1057
        %1059 = vrot.lane.b32.xlu0 %v405, 96
        %v1060 = vpop.permute.xlu0 %1059
        %1061 = vrot.lane.b32.xlu0 %v406, 96
        %v1062 = vpop.permute.xlu0 %1061
        %1068 = vrot.lane.b32.xlu0 %v407, 96
        %v1069 = vpop.permute.xlu0 %1068
        %v1072 = vsel %vm574, %v1046, 0
        %v1075 = vsel %vm574, %v1049, 0
        %1077 = vmatpush.msra.mxu0 0.0
        %1078 = vmatpush.msra.mxu0 0.0
        %1079 = vmatpush.msra.mxu0 0.0
        %1080 = vmatpush.msra.mxu0 0.0
        %1081 = vmatpush.msra.mxu0 0.0
        %1082 = vmatpush.msra.mxu0 0.0
        %1083 = vmatpush.msra.mxu0 0.0
        %1084 = vmatpush.msra.mxu0 0.0
        %1085 = vmatpush.msra.mxu0 0.0
        %1086 = vmatpush.msra.mxu0 0.0
        %1087 = vmatpush.msra.mxu0 0.0
        %1088 = vmatpush.msra.mxu0 0.0
        %1089 = vmatpush.msra.mxu0 %v1062
        %1090 = vmatpush.msra.mxu0 %v1060
        %1091 = vmatpush.msra.mxu0 %v1058
        %1092 = vmatpush.msra.mxu0 %v1056
        %1093 = vmatmul.f32.gmra.mxu0 %v1072
        %v1094 = vpop.f32.mrf.mxu0
        %v1095 = vadd.f32 %v1069, %v1094
        %1096 = vmatmul.f32.gmra.mxu0 %v1075
        %v1097 = vpop.f32.mrf.mxu0
        %v1098 = vadd.f32 %v1069, %v1097
        %1099 = vdwg.mxu0
        %v1100 = vmax.f32 %v1095, 0.0
        %v1101 = vmax.f32 %v1098, 0.0
        %1103 = vrot.lane.b32.xlu0 %v408, 96
        %v1104 = vpop.permute.xlu0 %1103
        %v1106 = vmul.f32 %v1100, %v1104
        %v1107 = vmul.f32 %v1101, %v1104
        %v1108 = vsel %vm574, %v1106, 0.0
        %1109 = vadd.xlane.f32.xlu0 %v1108
        %v1110 = vpop.xlane.xlu0 %1109
        %v1111 = vsel %vm574, %v1107, 0.0
        %1112 = vadd.xlane.f32.xlu0 %v1111
        %v1113 = vpop.xlane.xlu0 %1112
        %v1114 = vadd.f32 %v1110, %v409
        %v1115 = vadd.f32 %v1113, %v409
        %v1116 = vadd.f32 %v419, %v1114
        %v1117 = vadd.f32 %v420, %v1115
        %v1118 = vxor.u32 %v1116, 2147483648
        %v1119 = vxor.u32 %v1117, 2147483648
        %v1120 = vmul.f32 %v1118, 1.442695
        %v1121 = vpow.pop %v1120
        %v1122 = vmul.f32 %v1119, 1.442695
        %v1123 = vpow.pop %v1122
        %v1124 = vadd.f32 %v1121, 1.0
        %v1125 = vadd.f32 %v1123, 1.0
        %v1126 = vrcp.pop %v1124
        %v1127 = vmul.f32 %v1124, %v1126
        %v1128 = vsub.f32 1.0, %v1127
        %v1129 = vmul.f32 %v1126, %v1128
        %v1130 = vadd.f32 %v1126, %v1129
        %vm1131 = vweird.f32 %v1124
        %vm1132 = vweird.f32 %v1126
        %vm1133 = vmor %vm1131, %vm1132
        %v1134 = vsel %vm1133, %v1126, %v1130
        %v1135 = vand.u32 2147483647, %v1124
        %vm1136 = vcmp.eq.f32.partialorder %v1135, 8.507059e+37
        %v1137 = vand.u32 %v1124, 2147483648
        %v1138 = vor.u32 1.1754944e-38, %v1137
        %v1139 = vsel %vm1136, %v1138, %v1134
        %v1140 = vmul.f32 1.0, %v1139
        %v1141 = vrcp.pop %v1125
        %v1142 = vmul.f32 %v1125, %v1141
        %v1143 = vsub.f32 1.0, %v1142
        %v1144 = vmul.f32 %v1141, %v1143
        %v1145 = vadd.f32 %v1141, %v1144
        %vm1146 = vweird.f32 %v1125
        %vm1147 = vweird.f32 %v1141
        %vm1148 = vmor %vm1146, %vm1147
        %v1149 = vsel %vm1148, %v1141, %v1145
        %v1150 = vand.u32 2147483647, %v1125
        %vm1151 = vcmp.eq.f32.partialorder %v1150, 8.507059e+37
        %v1152 = vand.u32 %v1125, 2147483648
        %v1153 = vor.u32 1.1754944e-38, %v1152
        %v1154 = vsel %vm1151, %v1153, %v1149
        %v1155 = vmul.f32 1.0, %v1154
        %v1157 = vrot.slane %v917, 1
        %v1158 = vrot.slane %v917, 2
        %v1159 = vrot.slane %v917, 3
        %vm1160 = vcmask 1040384
        %v1161 = vsel %vm1160, %v917, %v1157
        %vm1162 = vcmask 1042434
        %v1163 = vsel %vm1162, %v1158, %v1159
        %v1164 = vsel %vm895, %v1161, %v1163
        %v1166 = vmul.f32 %v411, %v1164
        %v1168 = vperm.slane %v1166, 0
        %v1169 = vperm.slane %v1166, 1
        %v1172 = vmul.f32 %v377, %v1168
        %v1173 = vmul.f32 %v378, %v1169
        %v1174 = vmul.f32 %v381, %v1168
        %v1175 = vmul.f32 %v382, %v1169
        %1176 = vmatpush.xpose.msra.mxu0 0.0
        %1177 = vmatpush.xpose.msra.mxu0 0.0
        %1178 = vmatpush.xpose.msra.mxu0 0.0
        %1179 = vmatpush.xpose.msra.mxu0 0.0
        %1180 = vmatpush.xpose.msra.mxu0 0.0
        %1181 = vmatpush.xpose.msra.mxu0 0.0
        %1182 = vmatpush.xpose.msra.mxu0 0.0
        %1183 = vmatpush.xpose.msra.mxu0 0.0
        %1184 = vmatpush.xpose.msra.mxu0 0.0
        %1185 = vmatpush.xpose.msra.mxu0 0.0
        %1186 = vmatpush.xpose.msra.mxu0 0.0
        %1187 = vmatpush.xpose.msra.mxu0 0.0
        %1188 = vmatpush.xpose.msra.mxu0 0.0
        %1189 = vmatpush.xpose.msra.mxu0 0.0
        %1190 = vmatpush.xpose.msra.mxu0 %v383
        %1191 = vmatpush.xpose.msra.mxu0 %v379
        %1192 = vmatmul.f32.gmra.mxu0 %v1172
        %v1193 = vpop.f32.mrf.mxu0
        %v1194 = vadd.f32 0.0, %v1193
        %1195 = vmatmul.f32.gmra.mxu0 %v1174
        %v1196 = vpop.f32.mrf.mxu0
        %v1197 = vadd.f32 0.0, %v1196
        %1198 = vdwg.mxu0
        %1199 = vmatpush.xpose.msra.mxu0 0.0
        %1200 = vmatpush.xpose.msra.mxu0 0.0
        %1201 = vmatpush.xpose.msra.mxu0 0.0
        %1202 = vmatpush.xpose.msra.mxu0 0.0
        %1203 = vmatpush.xpose.msra.mxu0 0.0
        %1204 = vmatpush.xpose.msra.mxu0 0.0
        %1205 = vmatpush.xpose.msra.mxu0 0.0
        %1206 = vmatpush.xpose.msra.mxu0 0.0
        %1207 = vmatpush.xpose.msra.mxu0 0.0
        %1208 = vmatpush.xpose.msra.mxu0 0.0
        %1209 = vmatpush.xpose.msra.mxu0 0.0
        %1210 = vmatpush.xpose.msra.mxu0 0.0
        %1211 = vmatpush.xpose.msra.mxu0 0.0
        %1212 = vmatpush.xpose.msra.mxu0 0.0
        %1213 = vmatpush.xpose.msra.mxu0 %v384
        %1214 = vmatpush.xpose.msra.mxu0 %v380
        %1215 = vmatmul.f32.gmra.mxu0 %v1173
        %v1216 = vpop.f32.mrf.mxu0
        %v1217 = vadd.f32 %v1194, %v1216
        %1218 = vmatmul.f32.gmra.mxu0 %v1175
        %v1219 = vpop.f32.mrf.mxu0
        %v1220 = vadd.f32 %v1197, %v1219
        %1221 = vdwg.mxu0
        %v1223 = vsel %vm421, %v1217, 0
        %v1226 = vsel %vm421, %v1220, 0
        %1228 = vmatpush.msra.mxu0 0.0
        %1229 = vmatpush.msra.mxu0 0.0
        %1230 = vmatpush.msra.mxu0 0.0
        %1231 = vmatpush.msra.mxu0 0.0
        %1232 = vmatpush.msra.mxu0 0.0
        %1233 = vmatpush.msra.mxu0 0.0
        %1234 = vmatpush.msra.mxu0 0.0
        %1235 = vmatpush.msra.mxu0 0.0
        %1236 = vmatpush.msra.mxu0 0.0
        %1237 = vmatpush.msra.mxu0 0.0
        %1238 = vmatpush.msra.mxu0 0.0
        %1239 = vmatpush.msra.mxu0 0.0
        %1240 = vmatpush.msra.mxu0 0.0
        %1241 = vmatpush.msra.mxu0 0.0
        %1242 = vmatpush.msra.mxu0 %v413
        %1243 = vmatpush.msra.mxu0 %v412
        %1244 = vmatmul.f32.gmra.mxu0 %v1223
        %v1245 = vpop.f32.mrf.mxu0
        %v1246 = vadd.f32 0.0, %v1245
        %1247 = vmatmul.f32.gmra.mxu0 %v1226
        %v1248 = vpop.f32.mrf.mxu0
        %v1249 = vadd.f32 0.0, %v1248
        %1250 = vdwg.mxu0
        %v1251 = vadd.f32 %v412, %v1246
        %v1252 = vadd.f32 %v413, %v1249
        %1253 = vst [vmem:[#allocation1] sm:$0xff] %v917
        %s1254 = scalar_lea.vmem [#allocation1], 1
        %v1255 = vld [vmem:[%s1254] ss:$2 sm:$0xff]
        %v1257 = vmul.f32 %v411, %v1255
        %v1259 = vperm.slane %v1257, 0
        %v1260 = vperm.slane %v1257, 1
        %v1263 = vmul.f32 %v377, %v1259
        %v1264 = vmul.f32 %v378, %v1260
        %v1265 = vmul.f32 %v381, %v1259
        %v1266 = vmul.f32 %v382, %v1260
        %1267 = vmatpush.xpose.msra.mxu0 0.0
        %1268 = vmatpush.xpose.msra.mxu0 0.0
        %1269 = vmatpush.xpose.msra.mxu0 0.0
        %1270 = vmatpush.xpose.msra.mxu0 0.0
        %1271 = vmatpush.xpose.msra.mxu0 0.0
        %1272 = vmatpush.xpose.msra.mxu0 0.0
        %1273 = vmatpush.xpose.msra.mxu0 0.0
        %1274 = vmatpush.xpose.msra.mxu0 0.0
        %1275 = vmatpush.xpose.msra.mxu0 0.0
        %1276 = vmatpush.xpose.msra.mxu0 0.0
        %1277 = vmatpush.xpose.msra.mxu0 0.0
        %1278 = vmatpush.xpose.msra.mxu0 0.0
        %1279 = vmatpush.xpose.msra.mxu0 0.0
        %1280 = vmatpush.xpose.msra.mxu0 0.0
        %1281 = vmatpush.xpose.msra.mxu0 %v383
        %1282 = vmatpush.xpose.msra.mxu0 %v379
        %1283 = vmatmul.f32.gmra.mxu0 %v1263
        %v1284 = vpop.f32.mrf.mxu0
        %v1285 = vadd.f32 0.0, %v1284
        %1286 = vmatmul.f32.gmra.mxu0 %v1265
        %v1287 = vpop.f32.mrf.mxu0
        %v1288 = vadd.f32 0.0, %v1287
        %1289 = vdwg.mxu0
        %1290 = vmatpush.xpose.msra.mxu0 0.0
        %1291 = vmatpush.xpose.msra.mxu0 0.0
        %1292 = vmatpush.xpose.msra.mxu0 0.0
        %1293 = vmatpush.xpose.msra.mxu0 0.0
        %1294 = vmatpush.xpose.msra.mxu0 0.0
        %1295 = vmatpush.xpose.msra.mxu0 0.0
        %1296 = vmatpush.xpose.msra.mxu0 0.0
        %1297 = vmatpush.xpose.msra.mxu0 0.0
        %1298 = vmatpush.xpose.msra.mxu0 0.0
        %1299 = vmatpush.xpose.msra.mxu0 0.0
        %1300 = vmatpush.xpose.msra.mxu0 0.0
        %1301 = vmatpush.xpose.msra.mxu0 0.0
        %1302 = vmatpush.xpose.msra.mxu0 0.0
        %1303 = vmatpush.xpose.msra.mxu0 0.0
        %1304 = vmatpush.xpose.msra.mxu0 %v384
        %1305 = vmatpush.xpose.msra.mxu0 %v380
        %1306 = vmatmul.f32.gmra.mxu0 %v1264
        %v1307 = vpop.f32.mrf.mxu0
        %v1308 = vadd.f32 %v1285, %v1307
        %1309 = vmatmul.f32.gmra.mxu0 %v1266
        %v1310 = vpop.f32.mrf.mxu0
        %v1311 = vadd.f32 %v1288, %v1310
        %1312 = vdwg.mxu0
        %v1314 = vsel %vm421, %v1308, 0
        %v1317 = vsel %vm421, %v1311, 0
        %1319 = vmatpush.msra.mxu0 0.0
        %1320 = vmatpush.msra.mxu0 0.0
        %1321 = vmatpush.msra.mxu0 0.0
        %1322 = vmatpush.msra.mxu0 0.0
        %1323 = vmatpush.msra.mxu0 0.0
        %1324 = vmatpush.msra.mxu0 0.0
        %1325 = vmatpush.msra.mxu0 0.0
        %1326 = vmatpush.msra.mxu0 0.0
        %1327 = vmatpush.msra.mxu0 0.0
        %1328 = vmatpush.msra.mxu0 0.0
        %1329 = vmatpush.msra.mxu0 0.0
        %1330 = vmatpush.msra.mxu0 0.0
        %1331 = vmatpush.msra.mxu0 0.0
        %1332 = vmatpush.msra.mxu0 0.0
        %1333 = vmatpush.msra.mxu0 %v1249
        %1334 = vmatpush.msra.mxu0 %v1246
        %1335 = vmatmul.f32.gmra.mxu0 %v1314
        %v1336 = vpop.f32.mrf.mxu0
        %v1337 = vadd.f32 0.0, %v1336
        %1338 = vmatmul.f32.gmra.mxu0 %v1317
        %v1339 = vpop.f32.mrf.mxu0
        %v1340 = vadd.f32 0.0, %v1339
        %1341 = vdwg.mxu0
        %v1342 = vadd.f32 %v1251, %v1337
        %v1343 = vadd.f32 %v1252, %v1340
        %v1345 = vsel %vm421, %v375, 0
        %v1348 = vsel %vm421, %v376, 0
        %1350 = vmatpush.msra.mxu0 0.0
        %1351 = vmatpush.msra.mxu0 0.0
        %1352 = vmatpush.msra.mxu0 0.0
        %1353 = vmatpush.msra.mxu0 0.0
        %1354 = vmatpush.msra.mxu0 0.0
        %1355 = vmatpush.msra.mxu0 0.0
        %1356 = vmatpush.msra.mxu0 0.0
        %1357 = vmatpush.msra.mxu0 0.0
        %1358 = vmatpush.msra.mxu0 0.0
        %1359 = vmatpush.msra.mxu0 0.0
        %1360 = vmatpush.msra.mxu0 0.0
        %1361 = vmatpush.msra.mxu0 0.0
        %1362 = vmatpush.msra.mxu0 0.0
        %1363 = vmatpush.msra.mxu0 0.0
        %1364 = vmatpush.msra.mxu0 %v413
        %1365 = vmatpush.msra.mxu0 %v412
        %1366 = vmatmul.f32.gmra.mxu0 %v1345
        %v1367 = vpop.f32.mrf.mxu0
        %v1368 = vadd.f32 0.0, %v1367
        %1369 = vmatmul.f32.gmra.mxu0 %v1348
        %v1370 = vpop.f32.mrf.mxu0
        %v1371 = vadd.f32 0.0, %v1370
        %1372 = vdwg.mxu0
        %1374 = vset.pattern.permute.xlu0 0
        %1375 = vperm.xlu0 %1374, %v1012
        %v1376 = vpop.permute.xlu0 %1375
        %1379 = vset.pattern.permute.xlu0 0
        %1380 = vperm.xlu0 %1379, %v1027
        %v1381 = vpop.permute.xlu0 %1380
        %v1383 = vmul.f32 %v1376, %v412
        %v1384 = vmul.f32 %v1381, %v413
        %v1385 = vsub.f32 1.0, %v1012
        %v1386 = vsub.f32 1.0, %v1027
        %1388 = vset.pattern.permute.xlu0 0
        %1389 = vperm.xlu0 %1388, %v1385
        %v1390 = vpop.permute.xlu0 %1389
        %1393 = vset.pattern.permute.xlu0 0
        %1394 = vperm.xlu0 %1393, %v1386
        %v1395 = vpop.permute.xlu0 %1394
        %v1397 = vmul.f32 %v1390, %v1368
        %v1398 = vmul.f32 %v1395, %v1371
        %v1399 = vadd.f32 %v1383, %v1397
        %v1400 = vadd.f32 %v1384, %v1398
        %1401 = vmatpush.msra.mxu0 0.0
        %1402 = vmatpush.msra.mxu0 0.0
        %1403 = vmatpush.msra.mxu0 0.0
        %1404 = vmatpush.msra.mxu0 0.0
        %1405 = vmatpush.msra.mxu0 0.0
        %1406 = vmatpush.msra.mxu0 0.0
        %1407 = vmatpush.msra.mxu0 0.0
        %1408 = vmatpush.msra.mxu0 0.0
        %1409 = vmatpush.msra.mxu0 0.0
        %1410 = vmatpush.msra.mxu0 0.0
        %1411 = vmatpush.msra.mxu0 0.0
        %1412 = vmatpush.msra.mxu0 0.0
        %1413 = vmatpush.msra.mxu0 0.0
        %1414 = vmatpush.msra.mxu0 0.0
        %1415 = vmatpush.msra.mxu0 %v1400
        %1416 = vmatpush.msra.mxu0 %v1399
        %1417 = vmatmul.f32.gmra.mxu0 %v919
        %v1418 = vpop.f32.mrf.mxu0
        %v1419 = vadd.f32 0.0, %v1418
        %1420 = vmatmul.f32.gmra.mxu0 %v922
        %v1421 = vpop.f32.mrf.mxu0
        %v1422 = vadd.f32 0.0, %v1421
        %1423 = vdwg.mxu0
        %v1424 = vadd.f32 %v412, %v1419
        %v1425 = vadd.f32 %v413, %v1422
        %vm1426 = vcmask 7168
        %v1427 = vsel %vm1426, %v1012, 0.0
        %v1428 = vsel %vm1426, %v1027, 0.0
        %v1429 = vadd.f32 %v1427, %v1428
        %v1430 = vrot.slane %v1429, 4
        %v1431 = vadd.f32 %v1429, %v1430
        %v1432 = vrot.slane %v1431, 2
        %v1433 = vadd.f32 %v1431, %v1432
        %v1434 = vrot.slane %v1433, 1
        %v1435 = vadd.f32 %v1433, %v1434
        %v1436 = vmul.f32 %v1435, 0.0625
        %v1437 = vadd.f32 %v1436, 0.0
        %1438 = vmatpush.msra.mxu0 0.0
        %1439 = vmatpush.msra.mxu0 0.0
        %1440 = vmatpush.msra.mxu0 0.0
        %1441 = vmatpush.msra.mxu0 0.0
        %1442 = vmatpush.msra.mxu0 0.0
        %1443 = vmatpush.msra.mxu0 0.0
        %1444 = vmatpush.msra.mxu0 0.0
        %1445 = vmatpush.msra.mxu0 0.0
        %1446 = vmatpush.msra.mxu0 0.0
        %1447 = vmatpush.msra.mxu0 0.0
        %1448 = vmatpush.msra.mxu0 0.0
        %1449 = vmatpush.msra.mxu0 0.0
        %1450 = vmatpush.msra.mxu0 0.0
        %1451 = vmatpush.msra.mxu0 0.0
        %1452 = vmatpush.msra.mxu0 %v1422
        %1453 = vmatpush.msra.mxu0 %v1419
        %1454 = vmatmul.f32.gmra.mxu0 %v1345
        %v1455 = vpop.f32.mrf.mxu0
        %v1456 = vadd.f32 0.0, %v1455
        %1457 = vmatmul.f32.gmra.mxu0 %v1348
        %v1458 = vpop.f32.mrf.mxu0
        %v1459 = vadd.f32 0.0, %v1458
        %1460 = vdwg.mxu0
        %1462 = vset.pattern.permute.xlu0 1
        %1463 = vperm.xlu0 %1462, %v1140
        %v1464 = vpop.permute.xlu0 %1463
        %1467 = vset.pattern.permute.xlu0 1
        %1468 = vperm.xlu0 %1467, %v1155
        %v1469 = vpop.permute.xlu0 %1468
        %v1471 = vmul.f32 %v1464, %v1419
        %v1472 = vmul.f32 %v1469, %v1422
        %v1473 = vsub.f32 1.0, %v1140
        %v1474 = vsub.f32 1.0, %v1155
        %1476 = vset.pattern.permute.xlu0 1
        %1477 = vperm.xlu0 %1476, %v1473
        %v1478 = vpop.permute.xlu0 %1477
        %1481 = vset.pattern.permute.xlu0 1
        %1482 = vperm.xlu0 %1481, %v1474
        %v1483 = vpop.permute.xlu0 %1482
        %v1485 = vmul.f32 %v1478, %v1456
        %v1486 = vmul.f32 %v1483, %v1459
        %v1487 = vadd.f32 %v1471, %v1485
        %v1488 = vadd.f32 %v1472, %v1486
        %1489 = vmatpush.msra.mxu0 0.0
        %1490 = vmatpush.msra.mxu0 0.0
        %1491 = vmatpush.msra.mxu0 0.0
        %1492 = vmatpush.msra.mxu0 0.0
        %1493 = vmatpush.msra.mxu0 0.0
        %1494 = vmatpush.msra.mxu0 0.0
        %1495 = vmatpush.msra.mxu0 0.0
        %1496 = vmatpush.msra.mxu0 0.0
        %1497 = vmatpush.msra.mxu0 0.0
        %1498 = vmatpush.msra.mxu0 0.0
        %1499 = vmatpush.msra.mxu0 0.0
        %1500 = vmatpush.msra.mxu0 0.0
        %1501 = vmatpush.msra.mxu0 0.0
        %1502 = vmatpush.msra.mxu0 0.0
        %1503 = vmatpush.msra.mxu0 %v1488
        %1504 = vmatpush.msra.mxu0 %v1487
        %1505 = vmatmul.f32.gmra.mxu0 %v919
        %v1506 = vpop.f32.mrf.mxu0
        %v1507 = vadd.f32 0.0, %v1506
        %1508 = vmatmul.f32.gmra.mxu0 %v922
        %v1509 = vpop.f32.mrf.mxu0
        %v1510 = vadd.f32 0.0, %v1509
        %1511 = vdwg.mxu0
        %v1512 = vadd.f32 %v1424, %v1507
        %v1513 = vadd.f32 %v1425, %v1510
        %vm1514 = vcmask 15368
        %v1515 = vsel %vm1514, %v1140, 0.0
        %v1516 = vsel %vm1514, %v1155, 0.0
        %v1517 = vadd.f32 %v1515, %v1516
        %v1518 = vrot.slane %v1517, 4
        %v1519 = vadd.f32 %v1517, %v1518
        %v1520 = vrot.slane %v1519, 2
        %v1521 = vadd.f32 %v1519, %v1520
        %v1522 = vrot.slane %v1521, 1
        %v1523 = vadd.f32 %v1521, %v1522
        %v1524 = vmul.f32 %v1523, 0.0625
        %1526 = vrot.lane.b32.xlu0 %v1524, 127
        %v1527 = vpop.permute.xlu0 %1526
        %v1529 = vadd.f32 %v1437, %v1527
        %v1530 = vmul.f32 %v1529, 0.5
        %v1531 = vmul.f32 %v1342, 0.33333334
        %v1532 = vmul.f32 %v1343, 0.33333334
        %v1533 = vmul.f32 %v1512, 0.33333334
        %v1534 = vmul.f32 %v1513, 0.33333334
        %1537 = vrot.lane.b32.xlu0 %v1533, 32
        %v1538 = vpop.permute.xlu0 %1537
        %1539 = vrot.lane.b32.xlu0 %v1534, 32
        %v1540 = vpop.permute.xlu0 %1539
        %v1543 = vsel %vm574, %v1531, %v1538
        %v1544 = vsel %vm574, %v1532, %v1540
        %s1546 = vtos %v1530
        %v1547 = vstv %s1546
        %v1549 = vadd.f32 %v1547, 0.0
        %v1550 = vperm.slane %v917, 1
        %v1551 = vperm.slane %v917, 3
        %v1554 = vperm.slane %v1550, 1
        %v1555 = vperm.slane %v1551, 1
        %v1556 = vadd.f32 %v1554, 0.0
        %v1557 = vadd.f32 %v1555, 0.0
        %v1558 = vsel %vm848, %v1543, %v1549
        %v1559 = vsel %vm848, %v1544, %v1549
        %1560 = vst [vmem:[%s372] sm:$0xff] %v1558
        %1561 = vst [vmem:[%s372 + $0x8] sm:$0xff] %v1556
        %1562 = vst [vmem:[%s372 + $0x10] sm:$0xff] %v1557
        %1563 = vst [vmem:[%s372 + $0x18] sm:$0xff] %v1559
        %1564 = vst [vmem:[%s372 + $0x20] sm:$0xff] %v1556
        %1565 = vst [vmem:[%s372 + $0x28] sm:$0xff] %v1557
        %p1566 = scmp.lt.s32.totalorder %s20, 3
        %s1567 = scalar_select %p1566, %s20, 3
        %s1568 = smul.addr %s1567, 6
        %s1569 = smul.addr %s1568, 8
        %s1570 = scalar_lea.vmem %s7, %s1569
        // Predicated region
        $region57: #{normalgraph_ib_forward.1} parent=47 // pred_check
          %p1571 = pneg %p205
        $region58: #{normalgraph_ib_forward.1} parent=47 // pred_check_branch
          %1573 = sbr.rel (%p1571) target = $region60
        $region59: #{normalgraph_ib_forward.1} parent=47 // pred_region
          _
        $region60: #{normalgraph_ib_forward.1} parent=47 // pred_fallthru
          _
      $region48: #{normalgraph_ib_forward.1} parent=5 // pred_fallthru
        _
      %p1574 = scmp.le.s32.totalorder 2, %s15
      // Predicated region
      $region61: #{normalgraph_ib_forward.1} parent=5 // pred_check
        %p1575 = pneg %p1574
      $region62: #{normalgraph_ib_forward.1} parent=5 // pred_check_branch
        %1577 = sbr.rel (%p1575) target = $region64
      $region63: #{normalgraph_ib_forward.1} parent=5 // pred_region
        %s1578 = ssub.s32 %s15, 2
        // Predicated region
        $region65: #{normalgraph_ib_forward.1} parent=63 // pred_check
          %p1579 = pneg %p211
        $region66: #{normalgraph_ib_forward.1} parent=63 // pred_check_branch
          %1581 = sbr.rel (%p1579) target = $region68
        $region67: #{normalgraph_ib_forward.1} parent=63 // pred_region
          %p1582 = scmp.lt.s32.totalorder %s21, 3
          %s1583 = scalar_select %p1582, %s21, 3
          %s1584 = smul.addr %s1583, 6
          %s1585 = smul.addr %s1584, 8
          %s1586 = scalar_lea.vmem %s7, %s1585
        $region68: #{normalgraph_ib_forward.1} parent=63 // pred_fallthru
          _
      $region64: #{normalgraph_ib_forward.1} parent=5 // pred_fallthru
        _
    $region6: #{normalgraph_ib_forward.1} parent=1 // loop_footer
      %s19 = sadd.s32 1, %s15
    $region7: #{normalgraph_ib_forward.1} parent=1 // loop_footer_branch
      %14 = sbr.rel target = $region3
    $region8: #{normalgraph_ib_forward.1} parent=1 // loop_exit
      _
    %1587 = vsyncpa [#allocation3], 1
    %s1588 = scalar_lea.sflag [#allocation3], 1
    %1589 = vsyncpa %s1588, 1
    %1590 = vsyncpa [#allocation5], 1

</llo_original>
